<compile_context>
chip_gen: v5e
topology: v5e:2x2
jax: 0.10.0
libtpu: 0.0.40
codegen_flags: <defaults>
</compile_context>

<pallas_src>
import functools

import jax
import jax.numpy as jnp
from jax.experimental import pallas as pl
from jax.experimental.pallas import tpu as pltpu


LEAKY_SLOPE = 0.2
BN_EPS = 1e-5
VMEM_LIMIT_BYTES = 48 * 1024 * 1024   # < v7x 64 MiB physical; > v5e 16 MiB default scope


def _leaky(x):
    # max(x, slope*x) == LeakyReLU(slope) for 0 < slope < 1: 2 VALU ops per vreg.
    return jnp.maximum(x, LEAKY_SLOPE * x)


def _features(x_ref, w1_ref, w2_ref, h1_dtype):
    """h2[2ndf, tile_p] = W2 @ LeakyReLU(W1_aug @ x_pack), channels-on-sublanes layout.

    x_pack carries a ones-row, so the conv1 bias is folded into W1_aug and zero
    (padded) pixel columns yield exactly-zero h1/h2.
    """
    h1 = jnp.dot(w1_ref[...], x_ref[...], preferred_element_type=h1_dtype)   # MXU
    h1 = _leaky(h1)
    if h1.dtype != w2_ref.dtype:
        h1 = h1.astype(w2_ref.dtype)
    return jnp.dot(w2_ref[...], h1, preferred_element_type=jnp.float32)      # MXU, f32 acc


def _stats_kernel(x_ref, w1_ref, w2_ref, sum_ref, sumsq_ref, *, h1_dtype):
    """Per-tile, lane-resident partial sums of h2 and h2^2 -> [1, 2ndf, 128] blocks."""
    h2 = _features(x_ref, w1_ref, w2_ref, h1_dtype)          # [2ndf, tile_p] f32
    c, tile_p = h2.shape
    s = jnp.zeros((c, 128), jnp.float32)
    ss = jnp.zeros((c, 128), jnp.float32)
    for k in range(tile_p // 128):                           # VALU adds; no XLU reduce
        blk = h2[:, k * 128:(k + 1) * 128]
        s = s + blk
        ss = ss + blk * blk
    sum_ref[0, :, :] = s
    sumsq_ref[0, :, :] = ss


def _apply_kernel(x_ref, w1_ref, w2s_ref, shift_ref, w3_ref, out_ref, *, h1_dtype):
    """Recompute h2 (BN scale pre-folded into w2s), add shift, LeakyReLU, 1-ch project."""
    h2 = _features(x_ref, w1_ref, w2s_ref, h1_dtype)         # already scale * (W2 @ h1)
    h3 = _leaky(h2 + shift_ref[...])
    out = jnp.sum(h3 * w3_ref[...], axis=0, keepdims=True)   # [1, tile_p]: VPU + sublane reduce
    out_ref[...] = out.astype(out_ref.dtype)


def _round_up(x, m):
    return ((x + m - 1) // m) * m


def _h1_elem_dtype():
    # bf16 elementwise only where the VPU natively supports it (v6e / v7x).
    try:
        kind = jax.devices()[0].device_kind.lower()
    except Exception:
        kind = ""
    return jnp.bfloat16 if ("v6" in kind or "v7" in kind) else jnp.float32


def pixel_discriminator(x, params, *, max_tile=8192):
    """x: NCHW float32. Returns [N, 1, H, W] matching the PyTorch module's forward."""
    N, C, H, W = x.shape
    P = N * H * W

    tile_p = min(max_tile, _round_up(P, 128))
    P_pad = _round_up(P, tile_p)
    num_tiles = P_pad // tile_p

    w1, b1, w2 = params["w1"], params["b1"], params["w2"]
    gamma, beta, w3 = params["gamma"], params["beta"], params["w3"]
    ndf, ndf2 = w1.shape[0], w2.shape[0]
    h1_dtype = _h1_elem_dtype()

    # ---- Pack input: [C_pad, P_pad] bf16 with a ones-row (folds conv1 bias). ----
    C_pad = _round_up(C + 1, 16)                 # bf16 sublane-tile friendly
    xt = jnp.transpose(x, (1, 0, 2, 3)).reshape(C, P)
    rows = [xt, jnp.ones((1, P), x.dtype)]
    if C_pad > C + 1:
        rows.append(jnp.zeros((C_pad - C - 1, P), x.dtype))
    x_pack = jnp.concatenate(rows, axis=0)
    x_pack = jnp.pad(x_pack, ((0, 0), (0, P_pad - P))).astype(jnp.bfloat16)

    # ---- Augmented conv1 weight: [ndf, C_pad] bf16 with the bias in column C. ----
    w1_aug = jnp.concatenate(
        [w1, b1, jnp.zeros((ndf, C_pad - C - 1), w1.dtype)], axis=1).astype(jnp.bfloat16)
    w2_bf16 = w2.astype(jnp.bfloat16)

    full = lambda arr: pl.BlockSpec(arr.shape, lambda t: (0,) * arr.ndim)
    cparams = lambda sem: pltpu.CompilerParams(
        dimension_semantics=sem, vmem_limit_bytes=VMEM_LIMIT_BYTES)

    # ---- Pass 1: per-tile lane-resident partial sums of h2 / h2^2 (parallel grid). ----
    psum, psumsq = pl.pallas_call(
        functools.partial(_stats_kernel, h1_dtype=h1_dtype),
        out_shape=(jax.ShapeDtypeStruct((num_tiles, ndf2, 128), jnp.float32),
                   jax.ShapeDtypeStruct((num_tiles, ndf2, 128), jnp.float32)),
        grid_spec=pltpu.PrefetchScalarGridSpec(
            num_scalar_prefetch=0,
            grid=(num_tiles,),
            in_specs=[pl.BlockSpec((C_pad, tile_p), lambda t: (0, t)),
                      full(w1_aug), full(w2_bf16)],
            out_specs=(pl.BlockSpec((1, ndf2, 128), lambda t: (t, 0, 0)),
                       pl.BlockSpec((1, ndf2, 128), lambda t: (t, 0, 0))),
        ),
        compiler_params=cparams(("parallel",)),
    )(x_pack, w1_aug, w2_bf16)

    # ---- BatchNorm2d training-mode stats + fold the scale into w2 (tiny JAX math). ----
    # TODO(synk): E[x^2]-E[x]^2 in f32 cancels at very large P; combine the per-tile
    # partials with a mean-shifted / Welford reduction for full fastMRI pixel counts.
    n = jnp.float32(P)                                   # true pixel count (pad cols are 0)
    sums = jnp.sum(psum, axis=(0, 2)).reshape(ndf2, 1)
    sumsqs = jnp.sum(psumsq, axis=(0, 2)).reshape(ndf2, 1)
    mean = sums / n
    var = jnp.maximum(sumsqs / n - mean * mean, 0.0)     # biased variance (training mode)
    inv = jax.lax.rsqrt(var + BN_EPS)
    scale = gamma * inv
    shift = beta - mean * scale
    w2_scaled = (w2 * scale).astype(jnp.bfloat16)        # BN scale folded into the matmul

    # ---- Pass 2: recompute h2, shift, LeakyReLU, final 1-channel projection. ----
    out_flat = pl.pallas_call(
        functools.partial(_apply_kernel, h1_dtype=h1_dtype),
        out_shape=jax.ShapeDtypeStruct((1, P_pad), jnp.float32),
        grid_spec=pltpu.PrefetchScalarGridSpec(
            num_scalar_prefetch=0,
            grid=(num_tiles,),
            in_specs=[pl.BlockSpec((C_pad, tile_p), lambda t: (0, t)),
                      full(w1_aug), full(w2_scaled), full(shift), full(w3)],
            out_specs=pl.BlockSpec((1, tile_p), lambda t: (0, t)),   # lane-dense output
        ),
        compiler_params=cparams(("parallel",)),
    )(x_pack, w1_aug, w2_scaled, shift, w3)

    out = out_flat[:, :P]
    return jnp.transpose(out.reshape(1, N, H, W), (1, 0, 2, 3))


def reference(x, p):
    """Pure-JAX f32 reference matching the PyTorch forward (training-mode BatchNorm)."""
    N, C, H, W = x.shape
    xt = jnp.transpose(x, (1, 0, 2, 3)).reshape(C, -1)

    def leaky(v):
        return jnp.where(v >= 0, v, LEAKY_SLOPE * v)

    h1 = leaky(p["w1"] @ xt + p["b1"])
    h2 = p["w2"] @ h1
    mean = h2.mean(axis=1, keepdims=True)
    var = ((h2 - mean) ** 2).mean(axis=1, keepdims=True)
    h2n = (h2 - mean) / jnp.sqrt(var + BN_EPS) * p["gamma"] + p["beta"]
    o = jnp.sum(leaky(h2n) * p["w3"], axis=0, keepdims=True)        # [1, P]
    return jnp.transpose(o.reshape(1, N, H, W), (1, 0, 2, 3))


def init_params(key, input_nc, ndf=64):
    ks = jax.random.split(key, 6)
    ndf2 = 2 * ndf
    return {
        # Conv2d 1x1 weights stored as [C_out, C_in]; kept f32 here -- the wrapper builds
        # the bf16 / bias-augmented / BN-folded copies that the kernels actually consume.
        "w1": 0.1 * jax.random.normal(ks[0], (ndf, input_nc), jnp.float32),
        "b1": 0.1 * jax.random.normal(ks[1], (ndf, 1), jnp.float32),
        "w2": 0.05 * jax.random.normal(ks[2], (ndf2, ndf), jnp.float32),
        "gamma": 1.0 + 0.1 * jax.random.normal(ks[3], (ndf2, 1), jnp.float32),
        "beta": 0.1 * jax.random.normal(ks[4], (ndf2, 1), jnp.float32),
        "w3": 0.05 * jax.random.normal(ks[5], (ndf2, 1), jnp.float32),
    }


if __name__ == "__main__":
    key = jax.random.PRNGKey(0)
    k_x, k_p = jax.random.split(key)

    N, C, H, W = 2, 4, 16, 16     # small NCHW input, input_nc = 4
    ndf = 64                      # module default

    x = jax.random.normal(k_x, (N, C, H, W), jnp.float32)
    params = init_params(k_p, input_nc=C, ndf=ndf)

    out = jax.jit(pixel_discriminator)(x, params)
    out = jax.block_until_ready(out)

    ref = reference(x, params)
    assert out.shape == (N, 1, H, W)
    # bf16 MXU operands (x / w1 / w2) introduce ~1% relative error vs the f32 reference.
    assert jnp.allclose(out, ref, atol=5e-2, rtol=5e-2), "mismatch vs reference"

    print("KERNEL_OK")
</pallas_src>

<mosaic_0001>
module attributes {stable_mosaic.version = 11 : i64} {
  func.func @_stats_kernel(%arg0: i32, %arg1: memref<16x512xbf16, #tpu.memory_space<vmem>>, %arg2: memref<64x16xbf16, #tpu.memory_space<vmem>>, %arg3: memref<128x64xbf16, #tpu.memory_space<vmem>>, %arg4: memref<1x128x128xf32, #tpu.memory_space<vmem>>, %arg5: memref<1x128x128xf32, #tpu.memory_space<vmem>>) attributes {dimension_semantics = [#tpu.dimension_semantics<parallel>], iteration_bounds = array<i64: 1>, scalar_prefetch = 0 : i64, scratch_operands = 0 : i64, tpu.core_type = #tpu.core_type<tc>, window_params = [{transform_indices = @transform_0, window_bounds = array<i64: 16, 512>}, {pipeline_mode = #tpu.pipeline_mode<synchronous>, transform_indices = @transform_1, window_bounds = array<i64: 64, 16>}, {pipeline_mode = #tpu.pipeline_mode<synchronous>, transform_indices = @transform_2, window_bounds = array<i64: 128, 64>}, {transform_indices = @transform_3, window_bounds = array<i64: 1, 128, 128>}, {transform_indices = @transform_4, window_bounds = array<i64: 1, 128, 128>}]} {
    %c0 = arith.constant 0 : index
    %c0_0 = arith.constant 0 : index
    %0 = vector.load %arg2[%c0, %c0_0] : memref<64x16xbf16, #tpu.memory_space<vmem>>, vector<64x16xbf16>
    %c0_1 = arith.constant 0 : index
    %c0_2 = arith.constant 0 : index
    %1 = vector.load %arg1[%c0_1, %c0_2] : memref<16x512xbf16, #tpu.memory_space<vmem>>, vector<16x512xbf16>
    %cst = arith.constant dense<0.000000e+00> : vector<64x512xf32>
    %2 = tpu.matmul %0, %1, %cst {dimension_numbers = #tpu.dot_dimension_numbers<[1], [0], [0], [1], [0, 0, 1, 1], [], []>} : vector<64x16xbf16>, vector<16x512xbf16>, vector<64x512xf32> -> vector<64x512xf32>
    %cst_3 = arith.constant 2.000000e-01 : f32
    %3 = vector.broadcast %cst_3 : f32 to vector<64x512xf32>
    %4 = arith.mulf %3, %2 : vector<64x512xf32>
    %5 = arith.maximumf %2, %4 : vector<64x512xf32>
    %6 = arith.truncf %5 : vector<64x512xf32> to vector<64x512xbf16>
    %c0_4 = arith.constant 0 : index
    %c0_5 = arith.constant 0 : index
    %7 = vector.load %arg3[%c0_4, %c0_5] : memref<128x64xbf16, #tpu.memory_space<vmem>>, vector<128x64xbf16>
    %cst_6 = arith.constant dense<0.000000e+00> : vector<128x512xf32>
    %8 = tpu.matmul %7, %6, %cst_6 {dimension_numbers = #tpu.dot_dimension_numbers<[1], [0], [0], [1], [0, 0, 1, 1], [], []>} : vector<128x64xbf16>, vector<64x512xbf16>, vector<128x512xf32> -> vector<128x512xf32>
    %cst_7 = arith.constant 0.000000e+00 : f32
    %9 = vector.broadcast %cst_7 : f32 to vector<128x128xf32>
    %cst_8 = arith.constant 0.000000e+00 : f32
    %10 = vector.broadcast %cst_8 : f32 to vector<128x128xf32>
    %11 = vector.extract_strided_slice %8 {offsets = [0, 0], sizes = [128, 128], strides = [1, 1]} : vector<128x512xf32> to vector<128x128xf32>
    %12 = arith.addf %9, %11 : vector<128x128xf32>
    %13 = arith.mulf %11, %11 : vector<128x128xf32>
    %14 = arith.addf %10, %13 : vector<128x128xf32>
    %15 = vector.extract_strided_slice %8 {offsets = [0, 128], sizes = [128, 128], strides = [1, 1]} : vector<128x512xf32> to vector<128x128xf32>
    %16 = arith.addf %12, %15 : vector<128x128xf32>
    %17 = arith.mulf %15, %15 : vector<128x128xf32>
    %18 = arith.addf %14, %17 : vector<128x128xf32>
    %19 = vector.extract_strided_slice %8 {offsets = [0, 256], sizes = [128, 128], strides = [1, 1]} : vector<128x512xf32> to vector<128x128xf32>
    %20 = arith.addf %16, %19 : vector<128x128xf32>
    %21 = arith.mulf %19, %19 : vector<128x128xf32>
    %22 = arith.addf %18, %21 : vector<128x128xf32>
    %23 = vector.extract_strided_slice %8 {offsets = [0, 384], sizes = [128, 128], strides = [1, 1]} : vector<128x512xf32> to vector<128x128xf32>
    %24 = arith.addf %20, %23 : vector<128x128xf32>
    %25 = arith.mulf %23, %23 : vector<128x128xf32>
    %26 = arith.addf %22, %25 : vector<128x128xf32>
    %c0_9 = arith.constant 0 : index
    %c0_10 = arith.constant 0 : index
    %c0_11 = arith.constant 0 : index
    %27 = vector.load %arg4[%c0_9, %c0_10, %c0_11] : memref<1x128x128xf32, #tpu.memory_space<vmem>>, vector<1x128x128xf32>
    %28 = vector.shape_cast %27 : vector<1x128x128xf32> to vector<128x128xf32>
    %29 = vector.shape_cast %24 : vector<128x128xf32> to vector<1x128x128xf32>
    tpu.vector_store %arg4[%c0_9, %c0_10, %c0_11], %29 {strides = array<i32>} : memref<1x128x128xf32, #tpu.memory_space<vmem>>, vector<1x128x128xf32>,
    %c0_12 = arith.constant 0 : index
    %c0_13 = arith.constant 0 : index
    %c0_14 = arith.constant 0 : index
    %30 = vector.load %arg5[%c0_12, %c0_13, %c0_14] : memref<1x128x128xf32, #tpu.memory_space<vmem>>, vector<1x128x128xf32>
    %31 = vector.shape_cast %30 : vector<1x128x128xf32> to vector<128x128xf32>
    %32 = vector.shape_cast %26 : vector<128x128xf32> to vector<1x128x128xf32>
    tpu.vector_store %arg5[%c0_12, %c0_13, %c0_14], %32 {strides = array<i32>} : memref<1x128x128xf32, #tpu.memory_space<vmem>>, vector<1x128x128xf32>,
    return
  }
  func.func @transform_0(%arg0: i32) -> (i32, i32) {
    %c0_i32 = arith.constant 0 : i32
    %c0_i32_0 = arith.constant 0 : i32
    return %c0_i32, %arg0 : i32, i32
  }
  func.func @transform_1(%arg0: i32) -> (i32, i32) {
    %c0_i32 = arith.constant 0 : i32
    %c0_i32_0 = arith.constant 0 : i32
    %c0_i32_1 = arith.constant 0 : i32
    return %c0_i32, %c0_i32_0 : i32, i32
  }
  func.func @transform_2(%arg0: i32) -> (i32, i32) {
    %c0_i32 = arith.constant 0 : i32
    %c0_i32_0 = arith.constant 0 : i32
    %c0_i32_1 = arith.constant 0 : i32
    return %c0_i32, %c0_i32_0 : i32, i32
  }
  func.func @transform_3(%arg0: i32) -> (i32, i32, i32) {
    %c0_i32 = arith.constant 0 : i32
    %c0_i32_0 = arith.constant 0 : i32
    %c0_i32_1 = arith.constant 0 : i32
    return %arg0, %c0_i32, %c0_i32_0 : i32, i32, i32
  }
  func.func @transform_4(%arg0: i32) -> (i32, i32, i32) {
    %c0_i32 = arith.constant 0 : i32
    %c0_i32_0 = arith.constant 0 : i32
    %c0_i32_1 = arith.constant 0 : i32
    return %arg0, %c0_i32, %c0_i32_0 : i32, i32, i32
  }
}

module attributes {stable_mosaic.version = 11 : i64} {
  func.func @_apply_kernel(%arg0: i32, %arg1: memref<16x512xbf16, #tpu.memory_space<vmem>>, %arg2: memref<64x16xbf16, #tpu.memory_space<vmem>>, %arg3: memref<128x64xbf16, #tpu.memory_space<vmem>>, %arg4: memref<128x1xf32, #tpu.memory_space<vmem>>, %arg5: memref<128x1xf32, #tpu.memory_space<vmem>>, %arg6: memref<1x512xf32, #tpu.memory_space<vmem>>) attributes {dimension_semantics = [#tpu.dimension_semantics<parallel>], iteration_bounds = array<i64: 1>, scalar_prefetch = 0 : i64, scratch_operands = 0 : i64, tpu.core_type = #tpu.core_type<tc>, window_params = [{transform_indices = @transform_0, window_bounds = array<i64: 16, 512>}, {pipeline_mode = #tpu.pipeline_mode<synchronous>, transform_indices = @transform_1, window_bounds = array<i64: 64, 16>}, {pipeline_mode = #tpu.pipeline_mode<synchronous>, transform_indices = @transform_2, window_bounds = array<i64: 128, 64>}, {pipeline_mode = #tpu.pipeline_mode<synchronous>, transform_indices = @transform_3, window_bounds = array<i64: 128, 1>}, {pipeline_mode = #tpu.pipeline_mode<synchronous>, transform_indices = @transform_4, window_bounds = array<i64: 128, 1>}, {transform_indices = @transform_5, window_bounds = array<i64: 1, 512>}]} {
    %c0 = arith.constant 0 : index
    %c0_0 = arith.constant 0 : index
    %0 = vector.load %arg2[%c0, %c0_0] : memref<64x16xbf16, #tpu.memory_space<vmem>>, vector<64x16xbf16>
    %c0_1 = arith.constant 0 : index
    %c0_2 = arith.constant 0 : index
    %1 = vector.load %arg1[%c0_1, %c0_2] : memref<16x512xbf16, #tpu.memory_space<vmem>>, vector<16x512xbf16>
    %cst = arith.constant dense<0.000000e+00> : vector<64x512xf32>
    %2 = tpu.matmul %0, %1, %cst {dimension_numbers = #tpu.dot_dimension_numbers<[1], [0], [0], [1], [0, 0, 1, 1], [], []>} : vector<64x16xbf16>, vector<16x512xbf16>, vector<64x512xf32> -> vector<64x512xf32>
    %cst_3 = arith.constant 2.000000e-01 : f32
    %3 = vector.broadcast %cst_3 : f32 to vector<64x512xf32>
    %4 = arith.mulf %3, %2 : vector<64x512xf32>
    %5 = arith.maximumf %2, %4 : vector<64x512xf32>
    %6 = arith.truncf %5 : vector<64x512xf32> to vector<64x512xbf16>
    %c0_4 = arith.constant 0 : index
    %c0_5 = arith.constant 0 : index
    %7 = vector.load %arg3[%c0_4, %c0_5] : memref<128x64xbf16, #tpu.memory_space<vmem>>, vector<128x64xbf16>
    %cst_6 = arith.constant dense<0.000000e+00> : vector<128x512xf32>
    %8 = tpu.matmul %7, %6, %cst_6 {dimension_numbers = #tpu.dot_dimension_numbers<[1], [0], [0], [1], [0, 0, 1, 1], [], []>} : vector<128x64xbf16>, vector<64x512xbf16>, vector<128x512xf32> -> vector<128x512xf32>
    %c0_7 = arith.constant 0 : index
    %c0_8 = arith.constant 0 : index
    %9 = vector.load %arg4[%c0_7, %c0_8] : memref<128x1xf32, #tpu.memory_space<vmem>>, vector<128x1xf32>
    %10 = vector.broadcast %9 : vector<128x1xf32> to vector<128x512xf32>
    %11 = arith.addf %8, %10 : vector<128x512xf32>
    %cst_9 = arith.constant 2.000000e-01 : f32
    %12 = vector.broadcast %cst_9 : f32 to vector<128x512xf32>
    %13 = arith.mulf %12, %11 : vector<128x512xf32>
    %14 = arith.maximumf %11, %13 : vector<128x512xf32>
    %c0_10 = arith.constant 0 : index
    %c0_11 = arith.constant 0 : index
    %15 = vector.load %arg5[%c0_10, %c0_11] : memref<128x1xf32, #tpu.memory_space<vmem>>, vector<128x1xf32>
    %16 = vector.broadcast %15 : vector<128x1xf32> to vector<128x512xf32>
    %17 = arith.mulf %14, %16 : vector<128x512xf32>
    %cst_12 = arith.constant dense<0.000000e+00> : vector<512xf32>
    %18 = vector.multi_reduction <add>, %17, %cst_12 [0] : vector<128x512xf32> to vector<512xf32>
    %19 = vector.shape_cast %18 : vector<512xf32> to vector<1x512xf32>
    %c0_13 = arith.constant 0 : index
    %c0_14 = arith.constant 0 : index
    %20 = vector.load %arg6[%c0_13, %c0_14] : memref<1x512xf32, #tpu.memory_space<vmem>>, vector<1x512xf32>
    tpu.vector_store %arg6[%c0_13, %c0_14], %19 {strides = array<i32>} : memref<1x512xf32, #tpu.memory_space<vmem>>, vector<1x512xf32>,
    return
  }
  func.func @transform_0(%arg0: i32) -> (i32, i32) {
    %c0_i32 = arith.constant 0 : i32
    %c0_i32_0 = arith.constant 0 : i32
    return %c0_i32, %arg0 : i32, i32
  }
  func.func @transform_1(%arg0: i32) -> (i32, i32) {
    %c0_i32 = arith.constant 0 : i32
    %c0_i32_0 = arith.constant 0 : i32
    %c0_i32_1 = arith.constant 0 : i32
    return %c0_i32, %c0_i32_0 : i32, i32
  }
  func.func @transform_2(%arg0: i32) -> (i32, i32) {
    %c0_i32 = arith.constant 0 : i32
    %c0_i32_0 = arith.constant 0 : i32
    %c0_i32_1 = arith.constant 0 : i32
    return %c0_i32, %c0_i32_0 : i32, i32
  }
  func.func @transform_3(%arg0: i32) -> (i32, i32) {
    %c0_i32 = arith.constant 0 : i32
    %c0_i32_0 = arith.constant 0 : i32
    %c0_i32_1 = arith.constant 0 : i32
    return %c0_i32, %c0_i32_0 : i32, i32
  }
  func.func @transform_4(%arg0: i32) -> (i32, i32) {
    %c0_i32 = arith.constant 0 : i32
    %c0_i32_0 = arith.constant 0 : i32
    %c0_i32_1 = arith.constant 0 : i32
    return %c0_i32, %c0_i32_0 : i32, i32
  }
  func.func @transform_5(%arg0: i32) -> (i32, i32) {
    %c0_i32 = arith.constant 0 : i32
    %c0_i32_0 = arith.constant 0 : i32
    return %c0_i32, %arg0 : i32, i32
  }
}

</mosaic_0001>

<llo_original>
// kernel: pixel_discriminator.2
$region0: #{pixel_discriminator.2}
  #allocation0 [shape = 'u32[]', space=smem, size = 0x4, offset = 0x4, fixed_abs, tag = 'smem constant byte address 0x4 - core index']
  #allocation1 [shape = 'u32[72,128]{1,0:T(1,128)}', space=vmem, size = 0x9000, scoped, tag = 'internal scratch']
  %s0 = inlined_call_operand.vmem [shape: bf16[16,512], index: 0, kind: input, shape index: {}]
  %s1 = inlined_call_operand.vmem [shape: bf16[64,16], index: 1, kind: input, shape index: {}]
  %s2 = inlined_call_operand.vmem [shape: bf16[128,64], index: 2, kind: input, shape index: {}]
  %s3 = inlined_call_operand.vmem [shape: f32[1,128,128], index: 3, kind: output, shape index: {0}]
  %s4 = inlined_call_operand.vmem [shape: f32[1,128,128], index: 4, kind: output, shape index: {1}]
  %5 = xla_tuple %s3, %s4
  %s6 = sld [smem:[#allocation0]]
  $region30: #{pixel_discriminator.2} parent=0
    _
  %s8 = ssub.s32 1, %s6
  %s9 = scalar_select 0, %s8, %s6
  // Predicated region
  $region2: #{pixel_discriminator.2} parent=0 // pred_check
    _
  $region3: #{pixel_discriminator.2} parent=0 // pred_check_branch
    %11 = sbr.rel (0) target = $region5
  $region4: #{pixel_discriminator.2} parent=0 // pred_region
    _
  $region5: #{pixel_discriminator.2} parent=0 // pred_fallthru
    _
  // Predicated region
  $region6: #{pixel_discriminator.2} parent=0 // pred_check
    _
  $region7: #{pixel_discriminator.2} parent=0 // pred_check_branch
    %13 = sbr.rel (0) target = $region9
  $region8: #{pixel_discriminator.2} parent=0 // pred_region
    _
  $region9: #{pixel_discriminator.2} parent=0 // pred_fallthru
    _
  // Predicated region
  $region10: #{pixel_discriminator.2} parent=0 // pred_check
    _
  $region11: #{pixel_discriminator.2} parent=0 // pred_check_branch
    %15 = sbr.rel (0) target = $region13
  $region12: #{pixel_discriminator.2} parent=0 // pred_region
    _
  $region13: #{pixel_discriminator.2} parent=0 // pred_fallthru
    _
  %v17 = vld [vmem:[%s1] sm:$0xf]
  %v18 = vld [vmem:[%s1 + $0x4] sm:$0xf]
  %v19 = vld [vmem:[%s1 + $0x8] sm:$0xf]
  %v20 = vld [vmem:[%s1 + $0xc] sm:$0xf]
  %v21 = vld [vmem:[%s1 + $0x10] sm:$0xf]
  %v22 = vld [vmem:[%s1 + $0x14] sm:$0xf]
  %v23 = vld [vmem:[%s1 + $0x18] sm:$0xf]
  %v24 = vld [vmem:[%s1 + $0x1c] sm:$0xf]
  %v25 = vld [vmem:[%s0] sm:$0xff]
  %v26 = vld [vmem:[%s0 + $0x8] sm:$0xff]
  %v27 = vld [vmem:[%s0 + $0x10] sm:$0xff]
  %v28 = vld [vmem:[%s0 + $0x18] sm:$0xff]
  %v37 = vunpack.c.l.b16 %v17
  %v38 = vunpack.c.l.b16 %v18
  %v39 = vunpack.c.l.b16 %v19
  %v40 = vunpack.c.l.b16 %v20
  %v41 = vunpack.c.l.b16 %v21
  %v42 = vunpack.c.l.b16 %v22
  %v43 = vunpack.c.l.b16 %v23
  %v44 = vunpack.c.l.b16 %v24
  %v45 = vpack.c.b16 %v38, %v37
  %v46 = vpack.c.b16 %v40, %v39
  %v47 = vpack.c.b16 %v42, %v41
  %v48 = vpack.c.b16 %v44, %v43
  %v53 = vunpack.c.l.b16 %v25
  %v54 = vunpack.c.h.b16 %v25
  %v55 = vunpack.c.l.b16 %v26
  %v56 = vunpack.c.h.b16 %v26
  %v57 = vunpack.c.l.b16 %v27
  %v58 = vunpack.c.h.b16 %v27
  %v59 = vunpack.c.l.b16 %v28
  %v60 = vunpack.c.h.b16 %v28
  %v61 = vpack.c.b16 %v57, %v53
  %v62 = vpack.c.b16 %v58, %v54
  %v63 = vpack.c.b16 %v59, %v55
  %v64 = vpack.c.b16 %v60, %v56
  %vm69 = vcmask 130048
  %v71 = vsel %vm69, %v45, 0
  %v74 = vsel %vm69, %v46, 0
  %v77 = vsel %vm69, %v47, 0
  %v80 = vsel %vm69, %v48, 0
  %82 = vmatpush.bf16.msra.mxu0 0
  %83 = vmatpush.bf16.msra.mxu0 0
  %84 = vmatpush.bf16.msra.mxu0 0
  %85 = vmatpush.bf16.msra.mxu0 0
  %86 = vmatpush.bf16.msra.mxu0 0
  %87 = vmatpush.bf16.msra.mxu0 0
  %88 = vmatpush.bf16.msra.mxu0 0
  %89 = vmatpush.bf16.msra.mxu0 %v61
  %90 = vmatmul.bf16.gmra.mxu0 %v71
  %v91 = vpop.f32.mrf.mxu0
  %v92 = vadd.f32 0.0, %v91
  %v93 = vpop.f32.mrf.mxu0
  %v94 = vadd.f32 0.0, %v93
  %95 = vmatmul.bf16.gmra.mxu0 %v74
  %v96 = vpop.f32.mrf.mxu0
  %v97 = vadd.f32 0.0, %v96
  %v98 = vpop.f32.mrf.mxu0
  %v99 = vadd.f32 0.0, %v98
  %100 = vmatmul.bf16.gmra.mxu0 %v77
  %v101 = vpop.f32.mrf.mxu0
  %v102 = vadd.f32 0.0, %v101
  %v103 = vpop.f32.mrf.mxu0
  %v104 = vadd.f32 0.0, %v103
  %105 = vmatmul.bf16.gmra.mxu0 %v80
  %v106 = vpop.f32.mrf.mxu0
  %v107 = vadd.f32 0.0, %v106
  %v108 = vpop.f32.mrf.mxu0
  %v109 = vadd.f32 0.0, %v108
  %110 = vdwg.mxu0
  %111 = vmatpush.bf16.msra.mxu0 0
  %112 = vmatpush.bf16.msra.mxu0 0
  %113 = vmatpush.bf16.msra.mxu0 0
  %114 = vmatpush.bf16.msra.mxu0 0
  %115 = vmatpush.bf16.msra.mxu0 0
  %116 = vmatpush.bf16.msra.mxu0 0
  %117 = vmatpush.bf16.msra.mxu0 0
  %118 = vmatpush.bf16.msra.mxu0 %v62
  %119 = vmatmul.bf16.gmra.mxu0 %v71
  %v120 = vpop.f32.mrf.mxu0
  %v121 = vadd.f32 0.0, %v120
  %v122 = vpop.f32.mrf.mxu0
  %v123 = vadd.f32 0.0, %v122
  %124 = vmatmul.bf16.gmra.mxu0 %v74
  %v125 = vpop.f32.mrf.mxu0
  %v126 = vadd.f32 0.0, %v125
  %v127 = vpop.f32.mrf.mxu0
  %v128 = vadd.f32 0.0, %v127
  %129 = vmatmul.bf16.gmra.mxu0 %v77
  %v130 = vpop.f32.mrf.mxu0
  %v131 = vadd.f32 0.0, %v130
  %v132 = vpop.f32.mrf.mxu0
  %v133 = vadd.f32 0.0, %v132
  %134 = vmatmul.bf16.gmra.mxu0 %v80
  %v135 = vpop.f32.mrf.mxu0
  %v136 = vadd.f32 0.0, %v135
  %v137 = vpop.f32.mrf.mxu0
  %v138 = vadd.f32 0.0, %v137
  %139 = vdwg.mxu0
  %140 = vmatpush.bf16.msra.mxu0 0
  %141 = vmatpush.bf16.msra.mxu0 0
  %142 = vmatpush.bf16.msra.mxu0 0
  %143 = vmatpush.bf16.msra.mxu0 0
  %144 = vmatpush.bf16.msra.mxu0 0
  %145 = vmatpush.bf16.msra.mxu0 0
  %146 = vmatpush.bf16.msra.mxu0 0
  %147 = vmatpush.bf16.msra.mxu0 %v63
  %148 = vmatmul.bf16.gmra.mxu0 %v71
  %v149 = vpop.f32.mrf.mxu0
  %v150 = vadd.f32 0.0, %v149
  %v151 = vpop.f32.mrf.mxu0
  %v152 = vadd.f32 0.0, %v151
  %153 = vmatmul.bf16.gmra.mxu0 %v74
  %v154 = vpop.f32.mrf.mxu0
  %v155 = vadd.f32 0.0, %v154
  %v156 = vpop.f32.mrf.mxu0
  %v157 = vadd.f32 0.0, %v156
  %158 = vmatmul.bf16.gmra.mxu0 %v77
  %v159 = vpop.f32.mrf.mxu0
  %v160 = vadd.f32 0.0, %v159
  %v161 = vpop.f32.mrf.mxu0
  %v162 = vadd.f32 0.0, %v161
  %163 = vmatmul.bf16.gmra.mxu0 %v80
  %v164 = vpop.f32.mrf.mxu0
  %v165 = vadd.f32 0.0, %v164
  %v166 = vpop.f32.mrf.mxu0
  %v167 = vadd.f32 0.0, %v166
  %168 = vdwg.mxu0
  %169 = vmatpush.bf16.msra.mxu0 0
  %170 = vmatpush.bf16.msra.mxu0 0
  %171 = vmatpush.bf16.msra.mxu0 0
  %172 = vmatpush.bf16.msra.mxu0 0
  %173 = vmatpush.bf16.msra.mxu0 0
  %174 = vmatpush.bf16.msra.mxu0 0
  %175 = vmatpush.bf16.msra.mxu0 0
  %176 = vmatpush.bf16.msra.mxu0 %v64
  %177 = vmatmul.bf16.gmra.mxu0 %v71
  %v178 = vpop.f32.mrf.mxu0
  %v179 = vadd.f32 0.0, %v178
  %v180 = vpop.f32.mrf.mxu0
  %v181 = vadd.f32 0.0, %v180
  %182 = vmatmul.bf16.gmra.mxu0 %v74
  %v183 = vpop.f32.mrf.mxu0
  %v184 = vadd.f32 0.0, %v183
  %v185 = vpop.f32.mrf.mxu0
  %v186 = vadd.f32 0.0, %v185
  %187 = vmatmul.bf16.gmra.mxu0 %v77
  %v188 = vpop.f32.mrf.mxu0
  %v189 = vadd.f32 0.0, %v188
  %v190 = vpop.f32.mrf.mxu0
  %v191 = vadd.f32 0.0, %v190
  %192 = vmatmul.bf16.gmra.mxu0 %v80
  %v193 = vpop.f32.mrf.mxu0
  %v194 = vadd.f32 0.0, %v193
  %v195 = vpop.f32.mrf.mxu0
  %v196 = vadd.f32 0.0, %v195
  %197 = vdwg.mxu0
  %v198 = vmul.f32 %v92, 0.2
  %v199 = vmul.f32 %v121, 0.2
  %v200 = vmul.f32 %v150, 0.2
  %v201 = vmul.f32 %v179, 0.2
  %v202 = vmul.f32 %v94, 0.2
  %v203 = vmul.f32 %v123, 0.2
  %v204 = vmul.f32 %v152, 0.2
  %v205 = vmul.f32 %v181, 0.2
  %v206 = vmul.f32 %v97, 0.2
  %v207 = vmul.f32 %v126, 0.2
  %v208 = vmul.f32 %v155, 0.2
  %v209 = vmul.f32 %v184, 0.2
  %v210 = vmul.f32 %v99, 0.2
  %v211 = vmul.f32 %v128, 0.2
  %v212 = vmul.f32 %v157, 0.2
  %v213 = vmul.f32 %v186, 0.2
  %v214 = vmul.f32 %v102, 0.2
  %v215 = vmul.f32 %v131, 0.2
  %v216 = vmul.f32 %v160, 0.2
  %v217 = vmul.f32 %v189, 0.2
  %v218 = vmul.f32 %v104, 0.2
  %v219 = vmul.f32 %v133, 0.2
  %v220 = vmul.f32 %v162, 0.2
  %v221 = vmul.f32 %v191, 0.2
  %v222 = vmul.f32 %v107, 0.2
  %v223 = vmul.f32 %v136, 0.2
  %v224 = vmul.f32 %v165, 0.2
  %v225 = vmul.f32 %v194, 0.2
  %v226 = vmul.f32 %v109, 0.2
  %v227 = vmul.f32 %v138, 0.2
  %v228 = vmul.f32 %v167, 0.2
  %v229 = vmul.f32 %v196, 0.2
  %v230 = vmax.f32 %v92, %v198
  %v231 = vmax.f32 %v121, %v199
  %v232 = vmax.f32 %v150, %v200
  %v233 = vmax.f32 %v179, %v201
  %v234 = vmax.f32 %v94, %v202
  %v235 = vmax.f32 %v123, %v203
  %v236 = vmax.f32 %v152, %v204
  %v237 = vmax.f32 %v181, %v205
  %v238 = vmax.f32 %v97, %v206
  %v239 = vmax.f32 %v126, %v207
  %v240 = vmax.f32 %v155, %v208
  %v241 = vmax.f32 %v184, %v209
  %v242 = vmax.f32 %v99, %v210
  %v243 = vmax.f32 %v128, %v211
  %v244 = vmax.f32 %v157, %v212
  %v245 = vmax.f32 %v186, %v213
  %v246 = vmax.f32 %v102, %v214
  %v247 = vmax.f32 %v131, %v215
  %v248 = vmax.f32 %v160, %v216
  %v249 = vmax.f32 %v189, %v217
  %v250 = vmax.f32 %v104, %v218
  %v251 = vmax.f32 %v133, %v219
  %v252 = vmax.f32 %v162, %v220
  %v253 = vmax.f32 %v191, %v221
  %v254 = vmax.f32 %v107, %v222
  %v255 = vmax.f32 %v136, %v223
  %v256 = vmax.f32 %v165, %v224
  %v257 = vmax.f32 %v194, %v225
  %v258 = vmax.f32 %v109, %v226
  %v259 = vmax.f32 %v138, %v227
  %v260 = vmax.f32 %v167, %v228
  %v261 = vmax.f32 %v196, %v229
  %v262 = vpack.c.bf16 %v234, %v230
  %v263 = vpack.c.bf16 %v235, %v231
  %v264 = vpack.c.bf16 %v236, %v232
  %v265 = vpack.c.bf16 %v237, %v233
  %v266 = vpack.c.bf16 %v242, %v238
  %v267 = vpack.c.bf16 %v243, %v239
  %v268 = vpack.c.bf16 %v244, %v240
  %v269 = vpack.c.bf16 %v245, %v241
  %v270 = vpack.c.bf16 %v250, %v246
  %v271 = vpack.c.bf16 %v251, %v247
  %v272 = vpack.c.bf16 %v252, %v248
  %v273 = vpack.c.bf16 %v253, %v249
  %v274 = vpack.c.bf16 %v258, %v254
  %v275 = vpack.c.bf16 %v259, %v255
  %v276 = vpack.c.bf16 %v260, %v256
  %v277 = vpack.c.bf16 %v261, %v257
  %v278 = vld [vmem:[%s2] sm:$0xf]
  %v279 = vld [vmem:[%s2 + $0x4] sm:$0xf]
  %v280 = vld [vmem:[%s2 + $0x8] sm:$0xf]
  %v281 = vld [vmem:[%s2 + $0xc] sm:$0xf]
  %v282 = vld [vmem:[%s2 + $0x10] sm:$0xf]
  %v283 = vld [vmem:[%s2 + $0x14] sm:$0xf]
  %v284 = vld [vmem:[%s2 + $0x18] sm:$0xf]
  %v285 = vld [vmem:[%s2 + $0x1c] sm:$0xf]
  %v286 = vld [vmem:[%s2 + $0x20] sm:$0xf]
  %v287 = vld [vmem:[%s2 + $0x24] sm:$0xf]
  %v288 = vld [vmem:[%s2 + $0x28] sm:$0xf]
  %v289 = vld [vmem:[%s2 + $0x2c] sm:$0xf]
  %v290 = vld [vmem:[%s2 + $0x30] sm:$0xf]
  %v291 = vld [vmem:[%s2 + $0x34] sm:$0xf]
  %v292 = vld [vmem:[%s2 + $0x38] sm:$0xf]
  %v293 = vld [vmem:[%s2 + $0x3c] sm:$0xf]
  %v310 = vunpack.c.l.b16 %v278
  %v311 = vunpack.c.l.b16 %v279
  %v312 = vunpack.c.l.b16 %v280
  %v313 = vunpack.c.l.b16 %v281
  %v314 = vunpack.c.l.b16 %v282
  %v315 = vunpack.c.l.b16 %v283
  %v316 = vunpack.c.l.b16 %v284
  %v317 = vunpack.c.l.b16 %v285
  %v318 = vunpack.c.l.b16 %v286
  %v319 = vunpack.c.l.b16 %v287
  %v320 = vunpack.c.l.b16 %v288
  %v321 = vunpack.c.l.b16 %v289
  %v322 = vunpack.c.l.b16 %v290
  %v323 = vunpack.c.l.b16 %v291
  %v324 = vunpack.c.l.b16 %v292
  %v325 = vunpack.c.l.b16 %v293
  %v326 = vpack.c.b16 %v311, %v310
  %v327 = vpack.c.b16 %v313, %v312
  %v328 = vpack.c.b16 %v315, %v314
  %v329 = vpack.c.b16 %v317, %v316
  %v330 = vpack.c.b16 %v319, %v318
  %v331 = vpack.c.b16 %v321, %v320
  %v332 = vpack.c.b16 %v323, %v322
  %v333 = vpack.c.b16 %v325, %v324
  %vm334 = vcmask 523264
  %v336 = vsel %vm334, %v326, 0
  %v339 = vsel %vm334, %v327, 0
  %v342 = vsel %vm334, %v328, 0
  %v345 = vsel %vm334, %v329, 0
  %v348 = vsel %vm334, %v330, 0
  %v351 = vsel %vm334, %v331, 0
  %v354 = vsel %vm334, %v332, 0
  %v357 = vsel %vm334, %v333, 0
  %359 = vmatpush.bf16.msra.mxu0 0
  %360 = vmatpush.bf16.msra.mxu0 0
  %361 = vmatpush.bf16.msra.mxu0 0
  %362 = vmatpush.bf16.msra.mxu0 0
  %363 = vmatpush.bf16.msra.mxu0 %v274
  %364 = vmatpush.bf16.msra.mxu0 %v270
  %365 = vmatpush.bf16.msra.mxu0 %v266
  %366 = vmatpush.bf16.msra.mxu0 %v262
  %367 = vmatmul.bf16.gmra.mxu0 %v336
  %v368 = vpop.f32.mrf.mxu0
  %v369 = vadd.f32 0.0, %v368
  %v370 = vpop.f32.mrf.mxu0
  %v371 = vadd.f32 0.0, %v370
  %372 = vmatmul.bf16.gmra.mxu0 %v339
  %v373 = vpop.f32.mrf.mxu0
  %v374 = vadd.f32 0.0, %v373
  %v375 = vpop.f32.mrf.mxu0
  %v376 = vadd.f32 0.0, %v375
  %377 = vmatmul.bf16.gmra.mxu0 %v342
  %v378 = vpop.f32.mrf.mxu0
  %v379 = vadd.f32 0.0, %v378
  %v380 = vpop.f32.mrf.mxu0
  %v381 = vadd.f32 0.0, %v380
  %382 = vmatmul.bf16.gmra.mxu0 %v345
  %v383 = vpop.f32.mrf.mxu0
  %v384 = vadd.f32 0.0, %v383
  %v385 = vpop.f32.mrf.mxu0
  %v386 = vadd.f32 0.0, %v385
  %387 = vmatmul.bf16.gmra.mxu0 %v348
  %v388 = vpop.f32.mrf.mxu0
  %v389 = vadd.f32 0.0, %v388
  %v390 = vpop.f32.mrf.mxu0
  %v391 = vadd.f32 0.0, %v390
  %392 = vmatmul.bf16.gmra.mxu0 %v351
  %v393 = vpop.f32.mrf.mxu0
  %v394 = vadd.f32 0.0, %v393
  %v395 = vpop.f32.mrf.mxu0
  %v396 = vadd.f32 0.0, %v395
  %397 = vmatmul.bf16.gmra.mxu0 %v354
  %v398 = vpop.f32.mrf.mxu0
  %v399 = vadd.f32 0.0, %v398
  %v400 = vpop.f32.mrf.mxu0
  %v401 = vadd.f32 0.0, %v400
  %402 = vmatmul.bf16.gmra.mxu0 %v357
  %v403 = vpop.f32.mrf.mxu0
  %v404 = vadd.f32 0.0, %v403
  %v405 = vpop.f32.mrf.mxu0
  %v406 = vadd.f32 0.0, %v405
  %407 = vdwg.mxu0
  %408 = vmatpush.bf16.msra.mxu0 0
  %409 = vmatpush.bf16.msra.mxu0 0
  %410 = vmatpush.bf16.msra.mxu0 0
  %411 = vmatpush.bf16.msra.mxu0 0
  %412 = vmatpush.bf16.msra.mxu0 %v275
  %413 = vmatpush.bf16.msra.mxu0 %v271
  %414 = vmatpush.bf16.msra.mxu0 %v267
  %415 = vmatpush.bf16.msra.mxu0 %v263
  %416 = vmatmul.bf16.gmra.mxu0 %v336
  %v417 = vpop.f32.mrf.mxu0
  %v418 = vadd.f32 0.0, %v417
  %v419 = vpop.f32.mrf.mxu0
  %v420 = vadd.f32 0.0, %v419
  %421 = vmatmul.bf16.gmra.mxu0 %v339
  %v422 = vpop.f32.mrf.mxu0
  %v423 = vadd.f32 0.0, %v422
  %v424 = vpop.f32.mrf.mxu0
  %v425 = vadd.f32 0.0, %v424
  %426 = vmatmul.bf16.gmra.mxu0 %v342
  %v427 = vpop.f32.mrf.mxu0
  %v428 = vadd.f32 0.0, %v427
  %v429 = vpop.f32.mrf.mxu0
  %v430 = vadd.f32 0.0, %v429
  %431 = vmatmul.bf16.gmra.mxu0 %v345
  %v432 = vpop.f32.mrf.mxu0
  %v433 = vadd.f32 0.0, %v432
  %v434 = vpop.f32.mrf.mxu0
  %v435 = vadd.f32 0.0, %v434
  %436 = vmatmul.bf16.gmra.mxu0 %v348
  %v437 = vpop.f32.mrf.mxu0
  %v438 = vadd.f32 0.0, %v437
  %v439 = vpop.f32.mrf.mxu0
  %v440 = vadd.f32 0.0, %v439
  %441 = vmatmul.bf16.gmra.mxu0 %v351
  %v442 = vpop.f32.mrf.mxu0
  %v443 = vadd.f32 0.0, %v442
  %v444 = vpop.f32.mrf.mxu0
  %v445 = vadd.f32 0.0, %v444
  %446 = vmatmul.bf16.gmra.mxu0 %v354
  %v447 = vpop.f32.mrf.mxu0
  %v448 = vadd.f32 0.0, %v447
  %v449 = vpop.f32.mrf.mxu0
  %v450 = vadd.f32 0.0, %v449
  %451 = vmatmul.bf16.gmra.mxu0 %v357
  %v452 = vpop.f32.mrf.mxu0
  %v453 = vadd.f32 0.0, %v452
  %v454 = vpop.f32.mrf.mxu0
  %v455 = vadd.f32 0.0, %v454
  %456 = vdwg.mxu0
  %457 = vmatpush.bf16.msra.mxu0 0
  %458 = vmatpush.bf16.msra.mxu0 0
  %459 = vmatpush.bf16.msra.mxu0 0
  %460 = vmatpush.bf16.msra.mxu0 0
  %461 = vmatpush.bf16.msra.mxu0 %v276
  %462 = vmatpush.bf16.msra.mxu0 %v272
  %463 = vmatpush.bf16.msra.mxu0 %v268
  %464 = vmatpush.bf16.msra.mxu0 %v264
  %465 = vmatmul.bf16.gmra.mxu0 %v336
  %v466 = vpop.f32.mrf.mxu0
  %v467 = vadd.f32 0.0, %v466
  %v468 = vpop.f32.mrf.mxu0
  %v469 = vadd.f32 0.0, %v468
  %470 = vmatmul.bf16.gmra.mxu0 %v339
  %v471 = vpop.f32.mrf.mxu0
  %v472 = vadd.f32 0.0, %v471
  %v473 = vpop.f32.mrf.mxu0
  %v474 = vadd.f32 0.0, %v473
  %475 = vmatmul.bf16.gmra.mxu0 %v342
  %v476 = vpop.f32.mrf.mxu0
  %v477 = vadd.f32 0.0, %v476
  %v478 = vpop.f32.mrf.mxu0
  %v479 = vadd.f32 0.0, %v478
  %480 = vmatmul.bf16.gmra.mxu0 %v345
  %v481 = vpop.f32.mrf.mxu0
  %v482 = vadd.f32 0.0, %v481
  %v483 = vpop.f32.mrf.mxu0
  %v484 = vadd.f32 0.0, %v483
  %485 = vmatmul.bf16.gmra.mxu0 %v348
  %v486 = vpop.f32.mrf.mxu0
  %v487 = vadd.f32 0.0, %v486
  %v488 = vpop.f32.mrf.mxu0
  %v489 = vadd.f32 0.0, %v488
  %490 = vmatmul.bf16.gmra.mxu0 %v351
  %v491 = vpop.f32.mrf.mxu0
  %v492 = vadd.f32 0.0, %v491
  %v493 = vpop.f32.mrf.mxu0
  %v494 = vadd.f32 0.0, %v493
  %495 = vmatmul.bf16.gmra.mxu0 %v354
  %v496 = vpop.f32.mrf.mxu0
  %v497 = vadd.f32 0.0, %v496
  %v498 = vpop.f32.mrf.mxu0
  %v499 = vadd.f32 0.0, %v498
  %500 = vmatmul.bf16.gmra.mxu0 %v357
  %v501 = vpop.f32.mrf.mxu0
  %v502 = vadd.f32 0.0, %v501
  %v503 = vpop.f32.mrf.mxu0
  %v504 = vadd.f32 0.0, %v503
  %505 = vdwg.mxu0
  %506 = vmatpush.bf16.msra.mxu0 0
  %507 = vmatpush.bf16.msra.mxu0 0
  %508 = vmatpush.bf16.msra.mxu0 0
  %509 = vmatpush.bf16.msra.mxu0 0
  %510 = vmatpush.bf16.msra.mxu0 %v277
  %511 = vmatpush.bf16.msra.mxu0 %v273
  %512 = vmatpush.bf16.msra.mxu0 %v269
  %513 = vmatpush.bf16.msra.mxu0 %v265
  %514 = vmatmul.bf16.gmra.mxu0 %v336
  %v515 = vpop.f32.mrf.mxu0
  %v516 = vadd.f32 0.0, %v515
  %v517 = vpop.f32.mrf.mxu0
  %v518 = vadd.f32 0.0, %v517
  %519 = vmatmul.bf16.gmra.mxu0 %v339
  %v520 = vpop.f32.mrf.mxu0
  %v521 = vadd.f32 0.0, %v520
  %v522 = vpop.f32.mrf.mxu0
  %v523 = vadd.f32 0.0, %v522
  %524 = vmatmul.bf16.gmra.mxu0 %v342
  %v525 = vpop.f32.mrf.mxu0
  %v526 = vadd.f32 0.0, %v525
  %v527 = vpop.f32.mrf.mxu0
  %v528 = vadd.f32 0.0, %v527
  %529 = vmatmul.bf16.gmra.mxu0 %v345
  %v530 = vpop.f32.mrf.mxu0
  %v531 = vadd.f32 0.0, %v530
  %v532 = vpop.f32.mrf.mxu0
  %v533 = vadd.f32 0.0, %v532
  %534 = vmatmul.bf16.gmra.mxu0 %v348
  %v535 = vpop.f32.mrf.mxu0
  %v536 = vadd.f32 0.0, %v535
  %v537 = vpop.f32.mrf.mxu0
  %v538 = vadd.f32 0.0, %v537
  %539 = vmatmul.bf16.gmra.mxu0 %v351
  %v540 = vpop.f32.mrf.mxu0
  %v541 = vadd.f32 0.0, %v540
  %v542 = vpop.f32.mrf.mxu0
  %v543 = vadd.f32 0.0, %v542
  %544 = vmatmul.bf16.gmra.mxu0 %v354
  %v545 = vpop.f32.mrf.mxu0
  %v546 = vadd.f32 0.0, %v545
  %v547 = vpop.f32.mrf.mxu0
  %v548 = vadd.f32 0.0, %v547
  %549 = vmatmul.bf16.gmra.mxu0 %v357
  %v550 = vpop.f32.mrf.mxu0
  %v551 = vadd.f32 0.0, %v550
  %v552 = vpop.f32.mrf.mxu0
  %v553 = vadd.f32 0.0, %v552
  %554 = vdwg.mxu0
  %v555 = vadd.f32 %v369, 0.0
  %v556 = vadd.f32 %v371, 0.0
  %v557 = vadd.f32 %v374, 0.0
  %v558 = vadd.f32 %v376, 0.0
  %v559 = vadd.f32 %v379, 0.0
  %v560 = vadd.f32 %v381, 0.0
  %v561 = vadd.f32 %v384, 0.0
  %v562 = vadd.f32 %v386, 0.0
  %v563 = vadd.f32 %v389, 0.0
  %v564 = vadd.f32 %v391, 0.0
  %v565 = vadd.f32 %v394, 0.0
  %v566 = vadd.f32 %v396, 0.0
  %v567 = vadd.f32 %v399, 0.0
  %v568 = vadd.f32 %v401, 0.0
  %v569 = vadd.f32 %v404, 0.0
  %v570 = vadd.f32 %v406, 0.0
  %v571 = vmul.f32 %v369, %v369
  %v572 = vmul.f32 %v371, %v371
  %v573 = vmul.f32 %v374, %v374
  %v574 = vmul.f32 %v376, %v376
  %v575 = vmul.f32 %v379, %v379
  %v576 = vmul.f32 %v381, %v381
  %v577 = vmul.f32 %v384, %v384
  %v578 = vmul.f32 %v386, %v386
  %v579 = vmul.f32 %v389, %v389
  %v580 = vmul.f32 %v391, %v391
  %v581 = vmul.f32 %v394, %v394
  %v582 = vmul.f32 %v396, %v396
  %v583 = vmul.f32 %v399, %v399
  %v584 = vmul.f32 %v401, %v401
  %v585 = vmul.f32 %v404, %v404
  %v586 = vmul.f32 %v406, %v406
  %v587 = vadd.f32 %v571, 0.0
  %v588 = vadd.f32 %v572, 0.0
  %v589 = vadd.f32 %v573, 0.0
  %v590 = vadd.f32 %v574, 0.0
  %v591 = vadd.f32 %v575, 0.0
  %v592 = vadd.f32 %v576, 0.0
  %v593 = vadd.f32 %v577, 0.0
  %v594 = vadd.f32 %v578, 0.0
  %v595 = vadd.f32 %v579, 0.0
  %v596 = vadd.f32 %v580, 0.0
  %v597 = vadd.f32 %v581, 0.0
  %v598 = vadd.f32 %v582, 0.0
  %v599 = vadd.f32 %v583, 0.0
  %v600 = vadd.f32 %v584, 0.0
  %v601 = vadd.f32 %v585, 0.0
  %v602 = vadd.f32 %v586, 0.0
  %v603 = vadd.f32 %v555, %v418
  %v604 = vadd.f32 %v556, %v420
  %v605 = vadd.f32 %v557, %v423
  %v606 = vadd.f32 %v558, %v425
  %v607 = vadd.f32 %v559, %v428
  %v608 = vadd.f32 %v560, %v430
  %v609 = vadd.f32 %v561, %v433
  %v610 = vadd.f32 %v562, %v435
  %v611 = vadd.f32 %v563, %v438
  %v612 = vadd.f32 %v564, %v440
  %v613 = vadd.f32 %v565, %v443
  %v614 = vadd.f32 %v566, %v445
  %v615 = vadd.f32 %v567, %v448
  %v616 = vadd.f32 %v568, %v450
  %v617 = vadd.f32 %v569, %v453
  %v618 = vadd.f32 %v570, %v455
  %v619 = vmul.f32 %v418, %v418
  %v620 = vmul.f32 %v420, %v420
  %v621 = vmul.f32 %v423, %v423
  %v622 = vmul.f32 %v425, %v425
  %v623 = vmul.f32 %v428, %v428
  %v624 = vmul.f32 %v430, %v430
  %v625 = vmul.f32 %v433, %v433
  %v626 = vmul.f32 %v435, %v435
  %v627 = vmul.f32 %v438, %v438
  %v628 = vmul.f32 %v440, %v440
  %v629 = vmul.f32 %v443, %v443
  %v630 = vmul.f32 %v445, %v445
  %v631 = vmul.f32 %v448, %v448
  %v632 = vmul.f32 %v450, %v450
  %v633 = vmul.f32 %v453, %v453
  %v634 = vmul.f32 %v455, %v455
  %v635 = vadd.f32 %v587, %v619
  %v636 = vadd.f32 %v588, %v620
  %v637 = vadd.f32 %v589, %v621
  %v638 = vadd.f32 %v590, %v622
  %v639 = vadd.f32 %v591, %v623
  %v640 = vadd.f32 %v592, %v624
  %v641 = vadd.f32 %v593, %v625
  %v642 = vadd.f32 %v594, %v626
  %v643 = vadd.f32 %v595, %v627
  %v644 = vadd.f32 %v596, %v628
  %v645 = vadd.f32 %v597, %v629
  %v646 = vadd.f32 %v598, %v630
  %v647 = vadd.f32 %v599, %v631
  %v648 = vadd.f32 %v600, %v632
  %v649 = vadd.f32 %v601, %v633
  %v650 = vadd.f32 %v602, %v634
  %v651 = vadd.f32 %v603, %v467
  %v652 = vadd.f32 %v604, %v469
  %v653 = vadd.f32 %v605, %v472
  %v654 = vadd.f32 %v606, %v474
  %v655 = vadd.f32 %v607, %v477
  %v656 = vadd.f32 %v608, %v479
  %v657 = vadd.f32 %v609, %v482
  %v658 = vadd.f32 %v610, %v484
  %v659 = vadd.f32 %v611, %v487
  %v660 = vadd.f32 %v612, %v489
  %v661 = vadd.f32 %v613, %v492
  %v662 = vadd.f32 %v614, %v494
  %v663 = vadd.f32 %v615, %v497
  %v664 = vadd.f32 %v616, %v499
  %v665 = vadd.f32 %v617, %v502
  %v666 = vadd.f32 %v618, %v504
  %v667 = vmul.f32 %v467, %v467
  %v668 = vmul.f32 %v469, %v469
  %v669 = vmul.f32 %v472, %v472
  %v670 = vmul.f32 %v474, %v474
  %v671 = vmul.f32 %v477, %v477
  %v672 = vmul.f32 %v479, %v479
  %v673 = vmul.f32 %v482, %v482
  %v674 = vmul.f32 %v484, %v484
  %v675 = vmul.f32 %v487, %v487
  %v676 = vmul.f32 %v489, %v489
  %v677 = vmul.f32 %v492, %v492
  %v678 = vmul.f32 %v494, %v494
  %v679 = vmul.f32 %v497, %v497
  %v680 = vmul.f32 %v499, %v499
  %v681 = vmul.f32 %v502, %v502
  %v682 = vmul.f32 %v504, %v504
  %v683 = vadd.f32 %v635, %v667
  %v684 = vadd.f32 %v636, %v668
  %v685 = vadd.f32 %v637, %v669
  %v686 = vadd.f32 %v638, %v670
  %v687 = vadd.f32 %v639, %v671
  %v688 = vadd.f32 %v640, %v672
  %v689 = vadd.f32 %v641, %v673
  %v690 = vadd.f32 %v642, %v674
  %v691 = vadd.f32 %v643, %v675
  %v692 = vadd.f32 %v644, %v676
  %v693 = vadd.f32 %v645, %v677
  %v694 = vadd.f32 %v646, %v678
  %v695 = vadd.f32 %v647, %v679
  %v696 = vadd.f32 %v648, %v680
  %v697 = vadd.f32 %v649, %v681
  %v698 = vadd.f32 %v650, %v682
  %v699 = vadd.f32 %v651, %v516
  %v700 = vadd.f32 %v652, %v518
  %v701 = vadd.f32 %v653, %v521
  %v702 = vadd.f32 %v654, %v523
  %v703 = vadd.f32 %v655, %v526
  %v704 = vadd.f32 %v656, %v528
  %v705 = vadd.f32 %v657, %v531
  %v706 = vadd.f32 %v658, %v533
  %v707 = vadd.f32 %v659, %v536
  %v708 = vadd.f32 %v660, %v538
  %v709 = vadd.f32 %v661, %v541
  %v710 = vadd.f32 %v662, %v543
  %v711 = vadd.f32 %v663, %v546
  %v712 = vadd.f32 %v664, %v548
  %v713 = vadd.f32 %v665, %v551
  %v714 = vadd.f32 %v666, %v553
  %v715 = vmul.f32 %v516, %v516
  %v716 = vmul.f32 %v518, %v518
  %v717 = vmul.f32 %v521, %v521
  %v718 = vmul.f32 %v523, %v523
  %v719 = vmul.f32 %v526, %v526
  %v720 = vmul.f32 %v528, %v528
  %v721 = vmul.f32 %v531, %v531
  %v722 = vmul.f32 %v533, %v533
  %v723 = vmul.f32 %v536, %v536
  %v724 = vmul.f32 %v538, %v538
  %v725 = vmul.f32 %v541, %v541
  %v726 = vmul.f32 %v543, %v543
  %v727 = vmul.f32 %v546, %v546
  %v728 = vmul.f32 %v548, %v548
  %v729 = vmul.f32 %v551, %v551
  %v730 = vmul.f32 %v553, %v553
  %v731 = vadd.f32 %v683, %v715
  %v732 = vadd.f32 %v684, %v716
  %v733 = vadd.f32 %v685, %v717
  %v734 = vadd.f32 %v686, %v718
  %v735 = vadd.f32 %v687, %v719
  %v736 = vadd.f32 %v688, %v720
  %v737 = vadd.f32 %v689, %v721
  %v738 = vadd.f32 %v690, %v722
  %v739 = vadd.f32 %v691, %v723
  %v740 = vadd.f32 %v692, %v724
  %v741 = vadd.f32 %v693, %v725
  %v742 = vadd.f32 %v694, %v726
  %v743 = vadd.f32 %v695, %v727
  %v744 = vadd.f32 %v696, %v728
  %v745 = vadd.f32 %v697, %v729
  %v746 = vadd.f32 %v698, %v730
  %747 = vst [vmem:[%s3] sm:$0xff] %v699
  %748 = vst [vmem:[%s3 + $0x8] sm:$0xff] %v700
  %749 = vst [vmem:[%s3 + $0x10] sm:$0xff] %v701
  %750 = vst [vmem:[%s3 + $0x18] sm:$0xff] %v702
  %751 = vst [vmem:[%s3 + $0x20] sm:$0xff] %v703
  %752 = vst [vmem:[%s3 + $0x28] sm:$0xff] %v704
  %753 = vst [vmem:[%s3 + $0x30] sm:$0xff] %v705
  %754 = vst [vmem:[%s3 + $0x38] sm:$0xff] %v706
  %755 = vst [vmem:[%s3 + $0x40] sm:$0xff] %v707
  %756 = vst [vmem:[%s3 + $0x48] sm:$0xff] %v708
  %757 = vst [vmem:[%s3 + $0x50] sm:$0xff] %v709
  %758 = vst [vmem:[%s3 + $0x58] sm:$0xff] %v710
  %759 = vst [vmem:[%s3 + $0x60] sm:$0xff] %v711
  %760 = vst [vmem:[%s3 + $0x68] sm:$0xff] %v712
  %761 = vst [vmem:[%s3 + $0x70] sm:$0xff] %v713
  %762 = vst [vmem:[%s3 + $0x78] sm:$0xff] %v714
  %763 = vst [vmem:[%s4] sm:$0xff] %v731
  %764 = vst [vmem:[%s4 + $0x8] sm:$0xff] %v732
  %765 = vst [vmem:[%s4 + $0x10] sm:$0xff] %v733
  %766 = vst [vmem:[%s4 + $0x18] sm:$0xff] %v734
  %767 = vst [vmem:[%s4 + $0x20] sm:$0xff] %v735
  %768 = vst [vmem:[%s4 + $0x28] sm:$0xff] %v736
  %769 = vst [vmem:[%s4 + $0x30] sm:$0xff] %v737
  %770 = vst [vmem:[%s4 + $0x38] sm:$0xff] %v738
  %771 = vst [vmem:[%s4 + $0x40] sm:$0xff] %v739
  %772 = vst [vmem:[%s4 + $0x48] sm:$0xff] %v740
  %773 = vst [vmem:[%s4 + $0x50] sm:$0xff] %v741
  %774 = vst [vmem:[%s4 + $0x58] sm:$0xff] %v742
  %775 = vst [vmem:[%s4 + $0x60] sm:$0xff] %v743
  %776 = vst [vmem:[%s4 + $0x68] sm:$0xff] %v744
  %777 = vst [vmem:[%s4 + $0x70] sm:$0xff] %v745
  %778 = vst [vmem:[%s4 + $0x78] sm:$0xff] %v746
  // Predicated region
  $region14: #{pixel_discriminator.2} parent=0 // pred_check
    _
  $region15: #{pixel_discriminator.2} parent=0 // pred_check_branch
    %780 = sbr.rel (0) target = $region17
  $region16: #{pixel_discriminator.2} parent=0 // pred_region
    _
  $region17: #{pixel_discriminator.2} parent=0 // pred_fallthru
    _
  // Predicated region
  $region18: #{pixel_discriminator.2} parent=0 // pred_check
    _
  $region19: #{pixel_discriminator.2} parent=0 // pred_check_branch
    %782 = sbr.rel (0) target = $region21
  $region20: #{pixel_discriminator.2} parent=0 // pred_region
    _
  $region21: #{pixel_discriminator.2} parent=0 // pred_fallthru
    _
  // Predicated region
  $region22: #{pixel_discriminator.2} parent=0 // pred_check
    _
  $region23: #{pixel_discriminator.2} parent=0 // pred_check_branch
    %784 = sbr.rel (0) target = $region25
  $region24: #{pixel_discriminator.2} parent=0 // pred_region
    _
  $region25: #{pixel_discriminator.2} parent=0 // pred_fallthru
    _
  // Predicated region
  $region26: #{pixel_discriminator.2} parent=0 // pred_check
    _
  $region27: #{pixel_discriminator.2} parent=0 // pred_check_branch
    %786 = sbr.rel (0) target = $region29
  $region28: #{pixel_discriminator.2} parent=0 // pred_region
    _
  $region29: #{pixel_discriminator.2} parent=0 // pred_fallthru
    _

// kernel: pixel_discriminator.3
$region0: #{pixel_discriminator.3}
  #allocation0 [shape = 'u32[]', space=smem, size = 0x4, offset = 0x4, fixed_abs, tag = 'smem constant byte address 0x4 - core index']
  #allocation1 [shape = 'u32[72,128]{1,0:T(1,128)}', space=vmem, size = 0x9000, scoped, tag = 'internal scratch']
  %s0 = inlined_call_operand.vmem [shape: bf16[16,512], index: 0, kind: input, shape index: {}]
  %s1 = inlined_call_operand.vmem [shape: bf16[64,16], index: 1, kind: input, shape index: {}]
  %s2 = inlined_call_operand.vmem [shape: bf16[128,64], index: 2, kind: input, shape index: {}]
  %s3 = inlined_call_operand.vmem [shape: f32[128,1], index: 3, kind: input, shape index: {}]
  %s4 = inlined_call_operand.vmem [shape: f32[128,1], index: 4, kind: input, shape index: {}]
  %s5 = inlined_call_operand.vmem [shape: f32[1,512], index: 5, kind: output, shape index: {}]
  %s6 = sld [smem:[#allocation0]]
  $region30: #{pixel_discriminator.3} parent=0
    _
  %s8 = ssub.s32 1, %s6
  %s9 = scalar_select 0, %s8, %s6
  // Predicated region
  $region2: #{pixel_discriminator.3} parent=0 // pred_check
    _
  $region3: #{pixel_discriminator.3} parent=0 // pred_check_branch
    %11 = sbr.rel (0) target = $region5
  $region4: #{pixel_discriminator.3} parent=0 // pred_region
    _
  $region5: #{pixel_discriminator.3} parent=0 // pred_fallthru
    _
  // Predicated region
  $region6: #{pixel_discriminator.3} parent=0 // pred_check
    _
  $region7: #{pixel_discriminator.3} parent=0 // pred_check_branch
    %13 = sbr.rel (0) target = $region9
  $region8: #{pixel_discriminator.3} parent=0 // pred_region
    _
  $region9: #{pixel_discriminator.3} parent=0 // pred_fallthru
    _
  // Predicated region
  $region10: #{pixel_discriminator.3} parent=0 // pred_check
    _
  $region11: #{pixel_discriminator.3} parent=0 // pred_check_branch
    %15 = sbr.rel (0) target = $region13
  $region12: #{pixel_discriminator.3} parent=0 // pred_region
    _
  $region13: #{pixel_discriminator.3} parent=0 // pred_fallthru
    _
  // Predicated region
  $region14: #{pixel_discriminator.3} parent=0 // pred_check
    _
  $region15: #{pixel_discriminator.3} parent=0 // pred_check_branch
    %17 = sbr.rel (0) target = $region17
  $region16: #{pixel_discriminator.3} parent=0 // pred_region
    _
  $region17: #{pixel_discriminator.3} parent=0 // pred_fallthru
    _
  // Predicated region
  $region18: #{pixel_discriminator.3} parent=0 // pred_check
    _
  $region19: #{pixel_discriminator.3} parent=0 // pred_check_branch
    %19 = sbr.rel (0) target = $region21
  $region20: #{pixel_discriminator.3} parent=0 // pred_region
    _
  $region21: #{pixel_discriminator.3} parent=0 // pred_fallthru
    _
  %v21 = vld [vmem:[%s1] sm:$0xf]
  %v22 = vld [vmem:[%s1 + $0x4] sm:$0xf]
  %v23 = vld [vmem:[%s1 + $0x8] sm:$0xf]
  %v24 = vld [vmem:[%s1 + $0xc] sm:$0xf]
  %v25 = vld [vmem:[%s1 + $0x10] sm:$0xf]
  %v26 = vld [vmem:[%s1 + $0x14] sm:$0xf]
  %v27 = vld [vmem:[%s1 + $0x18] sm:$0xf]
  %v28 = vld [vmem:[%s1 + $0x1c] sm:$0xf]
  %v29 = vld [vmem:[%s0] sm:$0xff]
  %v30 = vld [vmem:[%s0 + $0x8] sm:$0xff]
  %v31 = vld [vmem:[%s0 + $0x10] sm:$0xff]
  %v32 = vld [vmem:[%s0 + $0x18] sm:$0xff]
  %v41 = vunpack.c.l.b16 %v21
  %v42 = vunpack.c.l.b16 %v22
  %v43 = vunpack.c.l.b16 %v23
  %v44 = vunpack.c.l.b16 %v24
  %v45 = vunpack.c.l.b16 %v25
  %v46 = vunpack.c.l.b16 %v26
  %v47 = vunpack.c.l.b16 %v27
  %v48 = vunpack.c.l.b16 %v28
  %v49 = vpack.c.b16 %v42, %v41
  %v50 = vpack.c.b16 %v44, %v43
  %v51 = vpack.c.b16 %v46, %v45
  %v52 = vpack.c.b16 %v48, %v47
  %v57 = vunpack.c.l.b16 %v29
  %v58 = vunpack.c.h.b16 %v29
  %v59 = vunpack.c.l.b16 %v30
  %v60 = vunpack.c.h.b16 %v30
  %v61 = vunpack.c.l.b16 %v31
  %v62 = vunpack.c.h.b16 %v31
  %v63 = vunpack.c.l.b16 %v32
  %v64 = vunpack.c.h.b16 %v32
  %v65 = vpack.c.b16 %v61, %v57
  %v66 = vpack.c.b16 %v62, %v58
  %v67 = vpack.c.b16 %v63, %v59
  %v68 = vpack.c.b16 %v64, %v60
  %vm73 = vcmask 130048
  %v75 = vsel %vm73, %v49, 0
  %v78 = vsel %vm73, %v50, 0
  %v81 = vsel %vm73, %v51, 0
  %v84 = vsel %vm73, %v52, 0
  %86 = vmatpush.bf16.msra.mxu0 0
  %87 = vmatpush.bf16.msra.mxu0 0
  %88 = vmatpush.bf16.msra.mxu0 0
  %89 = vmatpush.bf16.msra.mxu0 0
  %90 = vmatpush.bf16.msra.mxu0 0
  %91 = vmatpush.bf16.msra.mxu0 0
  %92 = vmatpush.bf16.msra.mxu0 0
  %93 = vmatpush.bf16.msra.mxu0 %v65
  %94 = vmatmul.bf16.gmra.mxu0 %v75
  %v95 = vpop.f32.mrf.mxu0
  %v96 = vadd.f32 0.0, %v95
  %v97 = vpop.f32.mrf.mxu0
  %v98 = vadd.f32 0.0, %v97
  %99 = vmatmul.bf16.gmra.mxu0 %v78
  %v100 = vpop.f32.mrf.mxu0
  %v101 = vadd.f32 0.0, %v100
  %v102 = vpop.f32.mrf.mxu0
  %v103 = vadd.f32 0.0, %v102
  %104 = vmatmul.bf16.gmra.mxu0 %v81
  %v105 = vpop.f32.mrf.mxu0
  %v106 = vadd.f32 0.0, %v105
  %v107 = vpop.f32.mrf.mxu0
  %v108 = vadd.f32 0.0, %v107
  %109 = vmatmul.bf16.gmra.mxu0 %v84
  %v110 = vpop.f32.mrf.mxu0
  %v111 = vadd.f32 0.0, %v110
  %v112 = vpop.f32.mrf.mxu0
  %v113 = vadd.f32 0.0, %v112
  %114 = vdwg.mxu0
  %115 = vmatpush.bf16.msra.mxu0 0
  %116 = vmatpush.bf16.msra.mxu0 0
  %117 = vmatpush.bf16.msra.mxu0 0
  %118 = vmatpush.bf16.msra.mxu0 0
  %119 = vmatpush.bf16.msra.mxu0 0
  %120 = vmatpush.bf16.msra.mxu0 0
  %121 = vmatpush.bf16.msra.mxu0 0
  %122 = vmatpush.bf16.msra.mxu0 %v66
  %123 = vmatmul.bf16.gmra.mxu0 %v75
  %v124 = vpop.f32.mrf.mxu0
  %v125 = vadd.f32 0.0, %v124
  %v126 = vpop.f32.mrf.mxu0
  %v127 = vadd.f32 0.0, %v126
  %128 = vmatmul.bf16.gmra.mxu0 %v78
  %v129 = vpop.f32.mrf.mxu0
  %v130 = vadd.f32 0.0, %v129
  %v131 = vpop.f32.mrf.mxu0
  %v132 = vadd.f32 0.0, %v131
  %133 = vmatmul.bf16.gmra.mxu0 %v81
  %v134 = vpop.f32.mrf.mxu0
  %v135 = vadd.f32 0.0, %v134
  %v136 = vpop.f32.mrf.mxu0
  %v137 = vadd.f32 0.0, %v136
  %138 = vmatmul.bf16.gmra.mxu0 %v84
  %v139 = vpop.f32.mrf.mxu0
  %v140 = vadd.f32 0.0, %v139
  %v141 = vpop.f32.mrf.mxu0
  %v142 = vadd.f32 0.0, %v141
  %143 = vdwg.mxu0
  %144 = vmatpush.bf16.msra.mxu0 0
  %145 = vmatpush.bf16.msra.mxu0 0
  %146 = vmatpush.bf16.msra.mxu0 0
  %147 = vmatpush.bf16.msra.mxu0 0
  %148 = vmatpush.bf16.msra.mxu0 0
  %149 = vmatpush.bf16.msra.mxu0 0
  %150 = vmatpush.bf16.msra.mxu0 0
  %151 = vmatpush.bf16.msra.mxu0 %v67
  %152 = vmatmul.bf16.gmra.mxu0 %v75
  %v153 = vpop.f32.mrf.mxu0
  %v154 = vadd.f32 0.0, %v153
  %v155 = vpop.f32.mrf.mxu0
  %v156 = vadd.f32 0.0, %v155
  %157 = vmatmul.bf16.gmra.mxu0 %v78
  %v158 = vpop.f32.mrf.mxu0
  %v159 = vadd.f32 0.0, %v158
  %v160 = vpop.f32.mrf.mxu0
  %v161 = vadd.f32 0.0, %v160
  %162 = vmatmul.bf16.gmra.mxu0 %v81
  %v163 = vpop.f32.mrf.mxu0
  %v164 = vadd.f32 0.0, %v163
  %v165 = vpop.f32.mrf.mxu0
  %v166 = vadd.f32 0.0, %v165
  %167 = vmatmul.bf16.gmra.mxu0 %v84
  %v168 = vpop.f32.mrf.mxu0
  %v169 = vadd.f32 0.0, %v168
  %v170 = vpop.f32.mrf.mxu0
  %v171 = vadd.f32 0.0, %v170
  %172 = vdwg.mxu0
  %173 = vmatpush.bf16.msra.mxu0 0
  %174 = vmatpush.bf16.msra.mxu0 0
  %175 = vmatpush.bf16.msra.mxu0 0
  %176 = vmatpush.bf16.msra.mxu0 0
  %177 = vmatpush.bf16.msra.mxu0 0
  %178 = vmatpush.bf16.msra.mxu0 0
  %179 = vmatpush.bf16.msra.mxu0 0
  %180 = vmatpush.bf16.msra.mxu0 %v68
  %181 = vmatmul.bf16.gmra.mxu0 %v75
  %v182 = vpop.f32.mrf.mxu0
  %v183 = vadd.f32 0.0, %v182
  %v184 = vpop.f32.mrf.mxu0
  %v185 = vadd.f32 0.0, %v184
  %186 = vmatmul.bf16.gmra.mxu0 %v78
  %v187 = vpop.f32.mrf.mxu0
  %v188 = vadd.f32 0.0, %v187
  %v189 = vpop.f32.mrf.mxu0
  %v190 = vadd.f32 0.0, %v189
  %191 = vmatmul.bf16.gmra.mxu0 %v81
  %v192 = vpop.f32.mrf.mxu0
  %v193 = vadd.f32 0.0, %v192
  %v194 = vpop.f32.mrf.mxu0
  %v195 = vadd.f32 0.0, %v194
  %196 = vmatmul.bf16.gmra.mxu0 %v84
  %v197 = vpop.f32.mrf.mxu0
  %v198 = vadd.f32 0.0, %v197
  %v199 = vpop.f32.mrf.mxu0
  %v200 = vadd.f32 0.0, %v199
  %201 = vdwg.mxu0
  %v202 = vmul.f32 %v96, 0.2
  %v203 = vmul.f32 %v125, 0.2
  %v204 = vmul.f32 %v154, 0.2
  %v205 = vmul.f32 %v183, 0.2
  %v206 = vmul.f32 %v98, 0.2
  %v207 = vmul.f32 %v127, 0.2
  %v208 = vmul.f32 %v156, 0.2
  %v209 = vmul.f32 %v185, 0.2
  %v210 = vmul.f32 %v101, 0.2
  %v211 = vmul.f32 %v130, 0.2
  %v212 = vmul.f32 %v159, 0.2
  %v213 = vmul.f32 %v188, 0.2
  %v214 = vmul.f32 %v103, 0.2
  %v215 = vmul.f32 %v132, 0.2
  %v216 = vmul.f32 %v161, 0.2
  %v217 = vmul.f32 %v190, 0.2
  %v218 = vmul.f32 %v106, 0.2
  %v219 = vmul.f32 %v135, 0.2
  %v220 = vmul.f32 %v164, 0.2
  %v221 = vmul.f32 %v193, 0.2
  %v222 = vmul.f32 %v108, 0.2
  %v223 = vmul.f32 %v137, 0.2
  %v224 = vmul.f32 %v166, 0.2
  %v225 = vmul.f32 %v195, 0.2
  %v226 = vmul.f32 %v111, 0.2
  %v227 = vmul.f32 %v140, 0.2
  %v228 = vmul.f32 %v169, 0.2
  %v229 = vmul.f32 %v198, 0.2
  %v230 = vmul.f32 %v113, 0.2
  %v231 = vmul.f32 %v142, 0.2
  %v232 = vmul.f32 %v171, 0.2
  %v233 = vmul.f32 %v200, 0.2
  %v234 = vmax.f32 %v96, %v202
  %v235 = vmax.f32 %v125, %v203
  %v236 = vmax.f32 %v154, %v204
  %v237 = vmax.f32 %v183, %v205
  %v238 = vmax.f32 %v98, %v206
  %v239 = vmax.f32 %v127, %v207
  %v240 = vmax.f32 %v156, %v208
  %v241 = vmax.f32 %v185, %v209
  %v242 = vmax.f32 %v101, %v210
  %v243 = vmax.f32 %v130, %v211
  %v244 = vmax.f32 %v159, %v212
  %v245 = vmax.f32 %v188, %v213
  %v246 = vmax.f32 %v103, %v214
  %v247 = vmax.f32 %v132, %v215
  %v248 = vmax.f32 %v161, %v216
  %v249 = vmax.f32 %v190, %v217
  %v250 = vmax.f32 %v106, %v218
  %v251 = vmax.f32 %v135, %v219
  %v252 = vmax.f32 %v164, %v220
  %v253 = vmax.f32 %v193, %v221
  %v254 = vmax.f32 %v108, %v222
  %v255 = vmax.f32 %v137, %v223
  %v256 = vmax.f32 %v166, %v224
  %v257 = vmax.f32 %v195, %v225
  %v258 = vmax.f32 %v111, %v226
  %v259 = vmax.f32 %v140, %v227
  %v260 = vmax.f32 %v169, %v228
  %v261 = vmax.f32 %v198, %v229
  %v262 = vmax.f32 %v113, %v230
  %v263 = vmax.f32 %v142, %v231
  %v264 = vmax.f32 %v171, %v232
  %v265 = vmax.f32 %v200, %v233
  %v266 = vpack.c.bf16 %v238, %v234
  %v267 = vpack.c.bf16 %v239, %v235
  %v268 = vpack.c.bf16 %v240, %v236
  %v269 = vpack.c.bf16 %v241, %v237
  %v270 = vpack.c.bf16 %v246, %v242
  %v271 = vpack.c.bf16 %v247, %v243
  %v272 = vpack.c.bf16 %v248, %v244
  %v273 = vpack.c.bf16 %v249, %v245
  %v274 = vpack.c.bf16 %v254, %v250
  %v275 = vpack.c.bf16 %v255, %v251
  %v276 = vpack.c.bf16 %v256, %v252
  %v277 = vpack.c.bf16 %v257, %v253
  %v278 = vpack.c.bf16 %v262, %v258
  %v279 = vpack.c.bf16 %v263, %v259
  %v280 = vpack.c.bf16 %v264, %v260
  %v281 = vpack.c.bf16 %v265, %v261
  %v282 = vld [vmem:[%s2] sm:$0xf]
  %v283 = vld [vmem:[%s2 + $0x4] sm:$0xf]
  %v284 = vld [vmem:[%s2 + $0x8] sm:$0xf]
  %v285 = vld [vmem:[%s2 + $0xc] sm:$0xf]
  %v286 = vld [vmem:[%s2 + $0x10] sm:$0xf]
  %v287 = vld [vmem:[%s2 + $0x14] sm:$0xf]
  %v288 = vld [vmem:[%s2 + $0x18] sm:$0xf]
  %v289 = vld [vmem:[%s2 + $0x1c] sm:$0xf]
  %v290 = vld [vmem:[%s2 + $0x20] sm:$0xf]
  %v291 = vld [vmem:[%s2 + $0x24] sm:$0xf]
  %v292 = vld [vmem:[%s2 + $0x28] sm:$0xf]
  %v293 = vld [vmem:[%s2 + $0x2c] sm:$0xf]
  %v294 = vld [vmem:[%s2 + $0x30] sm:$0xf]
  %v295 = vld [vmem:[%s2 + $0x34] sm:$0xf]
  %v296 = vld [vmem:[%s2 + $0x38] sm:$0xf]
  %v297 = vld [vmem:[%s2 + $0x3c] sm:$0xf]
  %v298 = vld [vmem:[%s3] sm:$0xff]
  %v299 = vld [vmem:[%s3 + $0x8] sm:$0xff]
  %v300 = vld [vmem:[%s3 + $0x10] sm:$0xff]
  %v301 = vld [vmem:[%s3 + $0x18] sm:$0xff]
  %v302 = vld [vmem:[%s3 + $0x20] sm:$0xff]
  %v303 = vld [vmem:[%s3 + $0x28] sm:$0xff]
  %v304 = vld [vmem:[%s3 + $0x30] sm:$0xff]
  %v305 = vld [vmem:[%s3 + $0x38] sm:$0xff]
  %v306 = vld [vmem:[%s3 + $0x40] sm:$0xff]
  %v307 = vld [vmem:[%s3 + $0x48] sm:$0xff]
  %v308 = vld [vmem:[%s3 + $0x50] sm:$0xff]
  %v309 = vld [vmem:[%s3 + $0x58] sm:$0xff]
  %v310 = vld [vmem:[%s3 + $0x60] sm:$0xff]
  %v311 = vld [vmem:[%s3 + $0x68] sm:$0xff]
  %v312 = vld [vmem:[%s3 + $0x70] sm:$0xff]
  %v313 = vld [vmem:[%s3 + $0x78] sm:$0xff]
  %315 = vset.pattern.permute.xlu0 0
  %316 = vperm.xlu0 %315, %v298
  %v317 = vpop.permute.xlu0 %316
  %320 = vset.pattern.permute.xlu0 0
  %321 = vperm.xlu0 %320, %v299
  %v322 = vpop.permute.xlu0 %321
  %325 = vset.pattern.permute.xlu0 0
  %326 = vperm.xlu0 %325, %v300
  %v327 = vpop.permute.xlu0 %326
  %330 = vset.pattern.permute.xlu0 0
  %331 = vperm.xlu0 %330, %v301
  %v332 = vpop.permute.xlu0 %331
  %335 = vset.pattern.permute.xlu0 0
  %336 = vperm.xlu0 %335, %v302
  %v337 = vpop.permute.xlu0 %336
  %340 = vset.pattern.permute.xlu0 0
  %341 = vperm.xlu0 %340, %v303
  %v342 = vpop.permute.xlu0 %341
  %345 = vset.pattern.permute.xlu0 0
  %346 = vperm.xlu0 %345, %v304
  %v347 = vpop.permute.xlu0 %346
  %350 = vset.pattern.permute.xlu0 0
  %351 = vperm.xlu0 %350, %v305
  %v352 = vpop.permute.xlu0 %351
  %355 = vset.pattern.permute.xlu0 0
  %356 = vperm.xlu0 %355, %v306
  %v357 = vpop.permute.xlu0 %356
  %360 = vset.pattern.permute.xlu0 0
  %361 = vperm.xlu0 %360, %v307
  %v362 = vpop.permute.xlu0 %361
  %365 = vset.pattern.permute.xlu0 0
  %366 = vperm.xlu0 %365, %v308
  %v367 = vpop.permute.xlu0 %366
  %370 = vset.pattern.permute.xlu0 0
  %371 = vperm.xlu0 %370, %v309
  %v372 = vpop.permute.xlu0 %371
  %375 = vset.pattern.permute.xlu0 0
  %376 = vperm.xlu0 %375, %v310
  %v377 = vpop.permute.xlu0 %376
  %380 = vset.pattern.permute.xlu0 0
  %381 = vperm.xlu0 %380, %v311
  %v382 = vpop.permute.xlu0 %381
  %385 = vset.pattern.permute.xlu0 0
  %386 = vperm.xlu0 %385, %v312
  %v387 = vpop.permute.xlu0 %386
  %390 = vset.pattern.permute.xlu0 0
  %391 = vperm.xlu0 %390, %v313
  %v392 = vpop.permute.xlu0 %391
  %v410 = vunpack.c.l.b16 %v282
  %v411 = vunpack.c.l.b16 %v283
  %v412 = vunpack.c.l.b16 %v284
  %v413 = vunpack.c.l.b16 %v285
  %v414 = vunpack.c.l.b16 %v286
  %v415 = vunpack.c.l.b16 %v287
  %v416 = vunpack.c.l.b16 %v288
  %v417 = vunpack.c.l.b16 %v289
  %v418 = vunpack.c.l.b16 %v290
  %v419 = vunpack.c.l.b16 %v291
  %v420 = vunpack.c.l.b16 %v292
  %v421 = vunpack.c.l.b16 %v293
  %v422 = vunpack.c.l.b16 %v294
  %v423 = vunpack.c.l.b16 %v295
  %v424 = vunpack.c.l.b16 %v296
  %v425 = vunpack.c.l.b16 %v297
  %v426 = vpack.c.b16 %v411, %v410
  %v427 = vpack.c.b16 %v413, %v412
  %v428 = vpack.c.b16 %v415, %v414
  %v429 = vpack.c.b16 %v417, %v416
  %v430 = vpack.c.b16 %v419, %v418
  %v431 = vpack.c.b16 %v421, %v420
  %v432 = vpack.c.b16 %v423, %v422
  %v433 = vpack.c.b16 %v425, %v424
  %vm434 = vcmask 523264
  %v436 = vsel %vm434, %v426, 0
  %v439 = vsel %vm434, %v427, 0
  %v442 = vsel %vm434, %v428, 0
  %v445 = vsel %vm434, %v429, 0
  %v448 = vsel %vm434, %v430, 0
  %v451 = vsel %vm434, %v431, 0
  %v454 = vsel %vm434, %v432, 0
  %v457 = vsel %vm434, %v433, 0
  %459 = vmatpush.bf16.msra.mxu0 0
  %460 = vmatpush.bf16.msra.mxu0 0
  %461 = vmatpush.bf16.msra.mxu0 0
  %462 = vmatpush.bf16.msra.mxu0 0
  %463 = vmatpush.bf16.msra.mxu0 %v278
  %464 = vmatpush.bf16.msra.mxu0 %v274
  %465 = vmatpush.bf16.msra.mxu0 %v270
  %466 = vmatpush.bf16.msra.mxu0 %v266
  %467 = vmatmul.bf16.gmra.mxu0 %v436
  %v468 = vpop.f32.mrf.mxu0
  %v469 = vadd.f32 %v317, %v468
  %v470 = vpop.f32.mrf.mxu0
  %v471 = vadd.f32 %v322, %v470
  %472 = vmatmul.bf16.gmra.mxu0 %v439
  %v473 = vpop.f32.mrf.mxu0
  %v474 = vadd.f32 %v327, %v473
  %v475 = vpop.f32.mrf.mxu0
  %v476 = vadd.f32 %v332, %v475
  %477 = vmatmul.bf16.gmra.mxu0 %v442
  %v478 = vpop.f32.mrf.mxu0
  %v479 = vadd.f32 %v337, %v478
  %v480 = vpop.f32.mrf.mxu0
  %v481 = vadd.f32 %v342, %v480
  %482 = vmatmul.bf16.gmra.mxu0 %v445
  %v483 = vpop.f32.mrf.mxu0
  %v484 = vadd.f32 %v347, %v483
  %v485 = vpop.f32.mrf.mxu0
  %v486 = vadd.f32 %v352, %v485
  %487 = vmatmul.bf16.gmra.mxu0 %v448
  %v488 = vpop.f32.mrf.mxu0
  %v489 = vadd.f32 %v357, %v488
  %v490 = vpop.f32.mrf.mxu0
  %v491 = vadd.f32 %v362, %v490
  %492 = vmatmul.bf16.gmra.mxu0 %v451
  %v493 = vpop.f32.mrf.mxu0
  %v494 = vadd.f32 %v367, %v493
  %v495 = vpop.f32.mrf.mxu0
  %v496 = vadd.f32 %v372, %v495
  %497 = vmatmul.bf16.gmra.mxu0 %v454
  %v498 = vpop.f32.mrf.mxu0
  %v499 = vadd.f32 %v377, %v498
  %v500 = vpop.f32.mrf.mxu0
  %v501 = vadd.f32 %v382, %v500
  %502 = vmatmul.bf16.gmra.mxu0 %v457
  %v503 = vpop.f32.mrf.mxu0
  %v504 = vadd.f32 %v387, %v503
  %v505 = vpop.f32.mrf.mxu0
  %v506 = vadd.f32 %v392, %v505
  %507 = vdwg.mxu0
  %508 = vmatpush.bf16.msra.mxu0 0
  %509 = vmatpush.bf16.msra.mxu0 0
  %510 = vmatpush.bf16.msra.mxu0 0
  %511 = vmatpush.bf16.msra.mxu0 0
  %512 = vmatpush.bf16.msra.mxu0 %v279
  %513 = vmatpush.bf16.msra.mxu0 %v275
  %514 = vmatpush.bf16.msra.mxu0 %v271
  %515 = vmatpush.bf16.msra.mxu0 %v267
  %516 = vmatmul.bf16.gmra.mxu0 %v436
  %v517 = vpop.f32.mrf.mxu0
  %v518 = vadd.f32 %v317, %v517
  %v519 = vpop.f32.mrf.mxu0
  %v520 = vadd.f32 %v322, %v519
  %521 = vmatmul.bf16.gmra.mxu0 %v439
  %v522 = vpop.f32.mrf.mxu0
  %v523 = vadd.f32 %v327, %v522
  %v524 = vpop.f32.mrf.mxu0
  %v525 = vadd.f32 %v332, %v524
  %526 = vmatmul.bf16.gmra.mxu0 %v442
  %v527 = vpop.f32.mrf.mxu0
  %v528 = vadd.f32 %v337, %v527
  %v529 = vpop.f32.mrf.mxu0
  %v530 = vadd.f32 %v342, %v529
  %531 = vmatmul.bf16.gmra.mxu0 %v445
  %v532 = vpop.f32.mrf.mxu0
  %v533 = vadd.f32 %v347, %v532
  %v534 = vpop.f32.mrf.mxu0
  %v535 = vadd.f32 %v352, %v534
  %536 = vmatmul.bf16.gmra.mxu0 %v448
  %v537 = vpop.f32.mrf.mxu0
  %v538 = vadd.f32 %v357, %v537
  %v539 = vpop.f32.mrf.mxu0
  %v540 = vadd.f32 %v362, %v539
  %541 = vmatmul.bf16.gmra.mxu0 %v451
  %v542 = vpop.f32.mrf.mxu0
  %v543 = vadd.f32 %v367, %v542
  %v544 = vpop.f32.mrf.mxu0
  %v545 = vadd.f32 %v372, %v544
  %546 = vmatmul.bf16.gmra.mxu0 %v454
  %v547 = vpop.f32.mrf.mxu0
  %v548 = vadd.f32 %v377, %v547
  %v549 = vpop.f32.mrf.mxu0
  %v550 = vadd.f32 %v382, %v549
  %551 = vmatmul.bf16.gmra.mxu0 %v457
  %v552 = vpop.f32.mrf.mxu0
  %v553 = vadd.f32 %v387, %v552
  %v554 = vpop.f32.mrf.mxu0
  %v555 = vadd.f32 %v392, %v554
  %556 = vdwg.mxu0
  %557 = vmatpush.bf16.msra.mxu0 0
  %558 = vmatpush.bf16.msra.mxu0 0
  %559 = vmatpush.bf16.msra.mxu0 0
  %560 = vmatpush.bf16.msra.mxu0 0
  %561 = vmatpush.bf16.msra.mxu0 %v280
  %562 = vmatpush.bf16.msra.mxu0 %v276
  %563 = vmatpush.bf16.msra.mxu0 %v272
  %564 = vmatpush.bf16.msra.mxu0 %v268
  %565 = vmatmul.bf16.gmra.mxu0 %v436
  %v566 = vpop.f32.mrf.mxu0
  %v567 = vadd.f32 %v317, %v566
  %v568 = vpop.f32.mrf.mxu0
  %v569 = vadd.f32 %v322, %v568
  %570 = vmatmul.bf16.gmra.mxu0 %v439
  %v571 = vpop.f32.mrf.mxu0
  %v572 = vadd.f32 %v327, %v571
  %v573 = vpop.f32.mrf.mxu0
  %v574 = vadd.f32 %v332, %v573
  %575 = vmatmul.bf16.gmra.mxu0 %v442
  %v576 = vpop.f32.mrf.mxu0
  %v577 = vadd.f32 %v337, %v576
  %v578 = vpop.f32.mrf.mxu0
  %v579 = vadd.f32 %v342, %v578
  %580 = vmatmul.bf16.gmra.mxu0 %v445
  %v581 = vpop.f32.mrf.mxu0
  %v582 = vadd.f32 %v347, %v581
  %v583 = vpop.f32.mrf.mxu0
  %v584 = vadd.f32 %v352, %v583
  %585 = vmatmul.bf16.gmra.mxu0 %v448
  %v586 = vpop.f32.mrf.mxu0
  %v587 = vadd.f32 %v357, %v586
  %v588 = vpop.f32.mrf.mxu0
  %v589 = vadd.f32 %v362, %v588
  %590 = vmatmul.bf16.gmra.mxu0 %v451
  %v591 = vpop.f32.mrf.mxu0
  %v592 = vadd.f32 %v367, %v591
  %v593 = vpop.f32.mrf.mxu0
  %v594 = vadd.f32 %v372, %v593
  %595 = vmatmul.bf16.gmra.mxu0 %v454
  %v596 = vpop.f32.mrf.mxu0
  %v597 = vadd.f32 %v377, %v596
  %v598 = vpop.f32.mrf.mxu0
  %v599 = vadd.f32 %v382, %v598
  %600 = vmatmul.bf16.gmra.mxu0 %v457
  %v601 = vpop.f32.mrf.mxu0
  %v602 = vadd.f32 %v387, %v601
  %v603 = vpop.f32.mrf.mxu0
  %v604 = vadd.f32 %v392, %v603
  %605 = vdwg.mxu0
  %606 = vmatpush.bf16.msra.mxu0 0
  %607 = vmatpush.bf16.msra.mxu0 0
  %608 = vmatpush.bf16.msra.mxu0 0
  %609 = vmatpush.bf16.msra.mxu0 0
  %610 = vmatpush.bf16.msra.mxu0 %v281
  %611 = vmatpush.bf16.msra.mxu0 %v277
  %612 = vmatpush.bf16.msra.mxu0 %v273
  %613 = vmatpush.bf16.msra.mxu0 %v269
  %614 = vmatmul.bf16.gmra.mxu0 %v436
  %v615 = vpop.f32.mrf.mxu0
  %v616 = vadd.f32 %v317, %v615
  %v617 = vpop.f32.mrf.mxu0
  %v618 = vadd.f32 %v322, %v617
  %619 = vmatmul.bf16.gmra.mxu0 %v439
  %v620 = vpop.f32.mrf.mxu0
  %v621 = vadd.f32 %v327, %v620
  %v622 = vpop.f32.mrf.mxu0
  %v623 = vadd.f32 %v332, %v622
  %624 = vmatmul.bf16.gmra.mxu0 %v442
  %v625 = vpop.f32.mrf.mxu0
  %v626 = vadd.f32 %v337, %v625
  %v627 = vpop.f32.mrf.mxu0
  %v628 = vadd.f32 %v342, %v627
  %629 = vmatmul.bf16.gmra.mxu0 %v445
  %v630 = vpop.f32.mrf.mxu0
  %v631 = vadd.f32 %v347, %v630
  %v632 = vpop.f32.mrf.mxu0
  %v633 = vadd.f32 %v352, %v632
  %634 = vmatmul.bf16.gmra.mxu0 %v448
  %v635 = vpop.f32.mrf.mxu0
  %v636 = vadd.f32 %v357, %v635
  %v637 = vpop.f32.mrf.mxu0
  %v638 = vadd.f32 %v362, %v637
  %639 = vmatmul.bf16.gmra.mxu0 %v451
  %v640 = vpop.f32.mrf.mxu0
  %v641 = vadd.f32 %v367, %v640
  %v642 = vpop.f32.mrf.mxu0
  %v643 = vadd.f32 %v372, %v642
  %644 = vmatmul.bf16.gmra.mxu0 %v454
  %v645 = vpop.f32.mrf.mxu0
  %v646 = vadd.f32 %v377, %v645
  %v647 = vpop.f32.mrf.mxu0
  %v648 = vadd.f32 %v382, %v647
  %649 = vmatmul.bf16.gmra.mxu0 %v457
  %v650 = vpop.f32.mrf.mxu0
  %v651 = vadd.f32 %v387, %v650
  %v652 = vpop.f32.mrf.mxu0
  %v653 = vadd.f32 %v392, %v652
  %654 = vdwg.mxu0
  %v655 = vmul.f32 %v469, 0.2
  %v656 = vmul.f32 %v518, 0.2
  %v657 = vmul.f32 %v567, 0.2
  %v658 = vmul.f32 %v616, 0.2
  %v659 = vmul.f32 %v471, 0.2
  %v660 = vmul.f32 %v520, 0.2
  %v661 = vmul.f32 %v569, 0.2
  %v662 = vmul.f32 %v618, 0.2
  %v663 = vmul.f32 %v474, 0.2
  %v664 = vmul.f32 %v523, 0.2
  %v665 = vmul.f32 %v572, 0.2
  %v666 = vmul.f32 %v621, 0.2
  %v667 = vmul.f32 %v476, 0.2
  %v668 = vmul.f32 %v525, 0.2
  %v669 = vmul.f32 %v574, 0.2
  %v670 = vmul.f32 %v623, 0.2
  %v671 = vmul.f32 %v479, 0.2
  %v672 = vmul.f32 %v528, 0.2
  %v673 = vmul.f32 %v577, 0.2
  %v674 = vmul.f32 %v626, 0.2
  %v675 = vmul.f32 %v481, 0.2
  %v676 = vmul.f32 %v530, 0.2
  %v677 = vmul.f32 %v579, 0.2
  %v678 = vmul.f32 %v628, 0.2
  %v679 = vmul.f32 %v484, 0.2
  %v680 = vmul.f32 %v533, 0.2
  %v681 = vmul.f32 %v582, 0.2
  %v682 = vmul.f32 %v631, 0.2
  %v683 = vmul.f32 %v486, 0.2
  %v684 = vmul.f32 %v535, 0.2
  %v685 = vmul.f32 %v584, 0.2
  %v686 = vmul.f32 %v633, 0.2
  %v687 = vmul.f32 %v489, 0.2
  %v688 = vmul.f32 %v538, 0.2
  %v689 = vmul.f32 %v587, 0.2
  %v690 = vmul.f32 %v636, 0.2
  %v691 = vmul.f32 %v491, 0.2
  %v692 = vmul.f32 %v540, 0.2
  %v693 = vmul.f32 %v589, 0.2
  %v694 = vmul.f32 %v638, 0.2
  %v695 = vmul.f32 %v494, 0.2
  %v696 = vmul.f32 %v543, 0.2
  %v697 = vmul.f32 %v592, 0.2
  %v698 = vmul.f32 %v641, 0.2
  %v699 = vmul.f32 %v496, 0.2
  %v700 = vmul.f32 %v545, 0.2
  %v701 = vmul.f32 %v594, 0.2
  %v702 = vmul.f32 %v643, 0.2
  %v703 = vmul.f32 %v499, 0.2
  %v704 = vmul.f32 %v548, 0.2
  %v705 = vmul.f32 %v597, 0.2
  %v706 = vmul.f32 %v646, 0.2
  %v707 = vmul.f32 %v501, 0.2
  %v708 = vmul.f32 %v550, 0.2
  %v709 = vmul.f32 %v599, 0.2
  %v710 = vmul.f32 %v648, 0.2
  %v711 = vmul.f32 %v504, 0.2
  %v712 = vmul.f32 %v553, 0.2
  %v713 = vmul.f32 %v602, 0.2
  %v714 = vmul.f32 %v651, 0.2
  %v715 = vmul.f32 %v506, 0.2
  %v716 = vmul.f32 %v555, 0.2
  %v717 = vmul.f32 %v604, 0.2
  %v718 = vmul.f32 %v653, 0.2
  %v719 = vmax.f32 %v469, %v655
  %v720 = vmax.f32 %v518, %v656
  %v721 = vmax.f32 %v567, %v657
  %v722 = vmax.f32 %v616, %v658
  %v723 = vmax.f32 %v471, %v659
  %v724 = vmax.f32 %v520, %v660
  %v725 = vmax.f32 %v569, %v661
  %v726 = vmax.f32 %v618, %v662
  %v727 = vmax.f32 %v474, %v663
  %v728 = vmax.f32 %v523, %v664
  %v729 = vmax.f32 %v572, %v665
  %v730 = vmax.f32 %v621, %v666
  %v731 = vmax.f32 %v476, %v667
  %v732 = vmax.f32 %v525, %v668
  %v733 = vmax.f32 %v574, %v669
  %v734 = vmax.f32 %v623, %v670
  %v735 = vmax.f32 %v479, %v671
  %v736 = vmax.f32 %v528, %v672
  %v737 = vmax.f32 %v577, %v673
  %v738 = vmax.f32 %v626, %v674
  %v739 = vmax.f32 %v481, %v675
  %v740 = vmax.f32 %v530, %v676
  %v741 = vmax.f32 %v579, %v677
  %v742 = vmax.f32 %v628, %v678
  %v743 = vmax.f32 %v484, %v679
  %v744 = vmax.f32 %v533, %v680
  %v745 = vmax.f32 %v582, %v681
  %v746 = vmax.f32 %v631, %v682
  %v747 = vmax.f32 %v486, %v683
  %v748 = vmax.f32 %v535, %v684
  %v749 = vmax.f32 %v584, %v685
  %v750 = vmax.f32 %v633, %v686
  %v751 = vmax.f32 %v489, %v687
  %v752 = vmax.f32 %v538, %v688
  %v753 = vmax.f32 %v587, %v689
  %v754 = vmax.f32 %v636, %v690
  %v755 = vmax.f32 %v491, %v691
  %v756 = vmax.f32 %v540, %v692
  %v757 = vmax.f32 %v589, %v693
  %v758 = vmax.f32 %v638, %v694
  %v759 = vmax.f32 %v494, %v695
  %v760 = vmax.f32 %v543, %v696
  %v761 = vmax.f32 %v592, %v697
  %v762 = vmax.f32 %v641, %v698
  %v763 = vmax.f32 %v496, %v699
  %v764 = vmax.f32 %v545, %v700
  %v765 = vmax.f32 %v594, %v701
  %v766 = vmax.f32 %v643, %v702
  %v767 = vmax.f32 %v499, %v703
  %v768 = vmax.f32 %v548, %v704
  %v769 = vmax.f32 %v597, %v705
  %v770 = vmax.f32 %v646, %v706
  %v771 = vmax.f32 %v501, %v707
  %v772 = vmax.f32 %v550, %v708
  %v773 = vmax.f32 %v599, %v709
  %v774 = vmax.f32 %v648, %v710
  %v775 = vmax.f32 %v504, %v711
  %v776 = vmax.f32 %v553, %v712
  %v777 = vmax.f32 %v602, %v713
  %v778 = vmax.f32 %v651, %v714
  %v779 = vmax.f32 %v506, %v715
  %v780 = vmax.f32 %v555, %v716
  %v781 = vmax.f32 %v604, %v717
  %v782 = vmax.f32 %v653, %v718
  %v783 = vld [vmem:[%s4] sm:$0xff]
  %v784 = vld [vmem:[%s4 + $0x8] sm:$0xff]
  %v785 = vld [vmem:[%s4 + $0x10] sm:$0xff]
  %v786 = vld [vmem:[%s4 + $0x18] sm:$0xff]
  %v787 = vld [vmem:[%s4 + $0x20] sm:$0xff]
  %v788 = vld [vmem:[%s4 + $0x28] sm:$0xff]
  %v789 = vld [vmem:[%s4 + $0x30] sm:$0xff]
  %v790 = vld [vmem:[%s4 + $0x38] sm:$0xff]
  %v791 = vld [vmem:[%s4 + $0x40] sm:$0xff]
  %v792 = vld [vmem:[%s4 + $0x48] sm:$0xff]
  %v793 = vld [vmem:[%s4 + $0x50] sm:$0xff]
  %v794 = vld [vmem:[%s4 + $0x58] sm:$0xff]
  %v795 = vld [vmem:[%s4 + $0x60] sm:$0xff]
  %v796 = vld [vmem:[%s4 + $0x68] sm:$0xff]
  %v797 = vld [vmem:[%s4 + $0x70] sm:$0xff]
  %v798 = vld [vmem:[%s4 + $0x78] sm:$0xff]
  %800 = vset.pattern.permute.xlu0 0
  %801 = vperm.xlu0 %800, %v783
  %v802 = vpop.permute.xlu0 %801
  %805 = vset.pattern.permute.xlu0 0
  %806 = vperm.xlu0 %805, %v784
  %v807 = vpop.permute.xlu0 %806
  %810 = vset.pattern.permute.xlu0 0
  %811 = vperm.xlu0 %810, %v785
  %v812 = vpop.permute.xlu0 %811
  %815 = vset.pattern.permute.xlu0 0
  %816 = vperm.xlu0 %815, %v786
  %v817 = vpop.permute.xlu0 %816
  %820 = vset.pattern.permute.xlu0 0
  %821 = vperm.xlu0 %820, %v787
  %v822 = vpop.permute.xlu0 %821
  %825 = vset.pattern.permute.xlu0 0
  %826 = vperm.xlu0 %825, %v788
  %v827 = vpop.permute.xlu0 %826
  %830 = vset.pattern.permute.xlu0 0
  %831 = vperm.xlu0 %830, %v789
  %v832 = vpop.permute.xlu0 %831
  %835 = vset.pattern.permute.xlu0 0
  %836 = vperm.xlu0 %835, %v790
  %v837 = vpop.permute.xlu0 %836
  %840 = vset.pattern.permute.xlu0 0
  %841 = vperm.xlu0 %840, %v791
  %v842 = vpop.permute.xlu0 %841
  %845 = vset.pattern.permute.xlu0 0
  %846 = vperm.xlu0 %845, %v792
  %v847 = vpop.permute.xlu0 %846
  %850 = vset.pattern.permute.xlu0 0
  %851 = vperm.xlu0 %850, %v793
  %v852 = vpop.permute.xlu0 %851
  %855 = vset.pattern.permute.xlu0 0
  %856 = vperm.xlu0 %855, %v794
  %v857 = vpop.permute.xlu0 %856
  %860 = vset.pattern.permute.xlu0 0
  %861 = vperm.xlu0 %860, %v795
  %v862 = vpop.permute.xlu0 %861
  %865 = vset.pattern.permute.xlu0 0
  %866 = vperm.xlu0 %865, %v796
  %v867 = vpop.permute.xlu0 %866
  %870 = vset.pattern.permute.xlu0 0
  %871 = vperm.xlu0 %870, %v797
  %v872 = vpop.permute.xlu0 %871
  %875 = vset.pattern.permute.xlu0 0
  %876 = vperm.xlu0 %875, %v798
  %v877 = vpop.permute.xlu0 %876
  %v879 = vmul.f32 %v719, %v802
  %v880 = vmul.f32 %v720, %v802
  %v881 = vmul.f32 %v721, %v802
  %v882 = vmul.f32 %v722, %v802
  %v883 = vmul.f32 %v723, %v807
  %v884 = vmul.f32 %v724, %v807
  %v885 = vmul.f32 %v725, %v807
  %v886 = vmul.f32 %v726, %v807
  %v887 = vmul.f32 %v727, %v812
  %v888 = vmul.f32 %v728, %v812
  %v889 = vmul.f32 %v729, %v812
  %v890 = vmul.f32 %v730, %v812
  %v891 = vmul.f32 %v731, %v817
  %v892 = vmul.f32 %v732, %v817
  %v893 = vmul.f32 %v733, %v817
  %v894 = vmul.f32 %v734, %v817
  %v895 = vmul.f32 %v735, %v822
  %v896 = vmul.f32 %v736, %v822
  %v897 = vmul.f32 %v737, %v822
  %v898 = vmul.f32 %v738, %v822
  %v899 = vmul.f32 %v739, %v827
  %v900 = vmul.f32 %v740, %v827
  %v901 = vmul.f32 %v741, %v827
  %v902 = vmul.f32 %v742, %v827
  %v903 = vmul.f32 %v743, %v832
  %v904 = vmul.f32 %v744, %v832
  %v905 = vmul.f32 %v745, %v832
  %v906 = vmul.f32 %v746, %v832
  %v907 = vmul.f32 %v747, %v837
  %v908 = vmul.f32 %v748, %v837
  %v909 = vmul.f32 %v749, %v837
  %v910 = vmul.f32 %v750, %v837
  %v911 = vmul.f32 %v751, %v842
  %v912 = vmul.f32 %v752, %v842
  %v913 = vmul.f32 %v753, %v842
  %v914 = vmul.f32 %v754, %v842
  %v915 = vmul.f32 %v755, %v847
  %v916 = vmul.f32 %v756, %v847
  %v917 = vmul.f32 %v757, %v847
  %v918 = vmul.f32 %v758, %v847
  %v919 = vmul.f32 %v759, %v852
  %v920 = vmul.f32 %v760, %v852
  %v921 = vmul.f32 %v761, %v852
  %v922 = vmul.f32 %v762, %v852
  %v923 = vmul.f32 %v763, %v857
  %v924 = vmul.f32 %v764, %v857
  %v925 = vmul.f32 %v765, %v857
  %v926 = vmul.f32 %v766, %v857
  %v927 = vmul.f32 %v767, %v862
  %v928 = vmul.f32 %v768, %v862
  %v929 = vmul.f32 %v769, %v862
  %v930 = vmul.f32 %v770, %v862
  %v931 = vmul.f32 %v771, %v867
  %v932 = vmul.f32 %v772, %v867
  %v933 = vmul.f32 %v773, %v867
  %v934 = vmul.f32 %v774, %v867
  %v935 = vmul.f32 %v775, %v872
  %v936 = vmul.f32 %v776, %v872
  %v937 = vmul.f32 %v777, %v872
  %v938 = vmul.f32 %v778, %v872
  %v939 = vmul.f32 %v779, %v877
  %v940 = vmul.f32 %v780, %v877
  %v941 = vmul.f32 %v781, %v877
  %v942 = vmul.f32 %v782, %v877
  %v943 = vadd.f32 %v879, %v883
  %v944 = vadd.f32 %v943, %v887
  %v945 = vadd.f32 %v944, %v891
  %v946 = vadd.f32 %v945, %v895
  %v947 = vadd.f32 %v946, %v899
  %v948 = vadd.f32 %v947, %v903
  %v949 = vadd.f32 %v948, %v907
  %v950 = vadd.f32 %v949, %v911
  %v951 = vadd.f32 %v950, %v915
  %v952 = vadd.f32 %v951, %v919
  %v953 = vadd.f32 %v952, %v923
  %v954 = vadd.f32 %v953, %v927
  %v955 = vadd.f32 %v954, %v931
  %v956 = vadd.f32 %v955, %v935
  %v957 = vadd.f32 %v956, %v939
  %v958 = vrot.slane %v957, 4
  %v959 = vadd.f32 %v957, %v958
  %v960 = vrot.slane %v959, 2
  %v961 = vadd.f32 %v959, %v960
  %v962 = vrot.slane %v961, 1
  %v963 = vadd.f32 %v961, %v962
  %v964 = vadd.f32 %v880, %v884
  %v965 = vadd.f32 %v964, %v888
  %v966 = vadd.f32 %v965, %v892
  %v967 = vadd.f32 %v966, %v896
  %v968 = vadd.f32 %v967, %v900
  %v969 = vadd.f32 %v968, %v904
  %v970 = vadd.f32 %v969, %v908
  %v971 = vadd.f32 %v970, %v912
  %v972 = vadd.f32 %v971, %v916
  %v973 = vadd.f32 %v972, %v920
  %v974 = vadd.f32 %v973, %v924
  %v975 = vadd.f32 %v974, %v928
  %v976 = vadd.f32 %v975, %v932
  %v977 = vadd.f32 %v976, %v936
  %v978 = vadd.f32 %v977, %v940
  %v979 = vrot.slane %v978, 4
  %v980 = vadd.f32 %v978, %v979
  %v981 = vrot.slane %v980, 2
  %v982 = vadd.f32 %v980, %v981
  %v983 = vrot.slane %v982, 1
  %v984 = vadd.f32 %v982, %v983
  %v985 = vadd.f32 %v881, %v885
  %v986 = vadd.f32 %v985, %v889
  %v987 = vadd.f32 %v986, %v893
  %v988 = vadd.f32 %v987, %v897
  %v989 = vadd.f32 %v988, %v901
  %v990 = vadd.f32 %v989, %v905
  %v991 = vadd.f32 %v990, %v909
  %v992 = vadd.f32 %v991, %v913
  %v993 = vadd.f32 %v992, %v917
  %v994 = vadd.f32 %v993, %v921
  %v995 = vadd.f32 %v994, %v925
  %v996 = vadd.f32 %v995, %v929
  %v997 = vadd.f32 %v996, %v933
  %v998 = vadd.f32 %v997, %v937
  %v999 = vadd.f32 %v998, %v941
  %v1000 = vrot.slane %v999, 4
  %v1001 = vadd.f32 %v999, %v1000
  %v1002 = vrot.slane %v1001, 2
  %v1003 = vadd.f32 %v1001, %v1002
  %v1004 = vrot.slane %v1003, 1
  %v1005 = vadd.f32 %v1003, %v1004
  %v1006 = vadd.f32 %v882, %v886
  %v1007 = vadd.f32 %v1006, %v890
  %v1008 = vadd.f32 %v1007, %v894
  %v1009 = vadd.f32 %v1008, %v898
  %v1010 = vadd.f32 %v1009, %v902
  %v1011 = vadd.f32 %v1010, %v906
  %v1012 = vadd.f32 %v1011, %v910
  %v1013 = vadd.f32 %v1012, %v914
  %v1014 = vadd.f32 %v1013, %v918
  %v1015 = vadd.f32 %v1014, %v922
  %v1016 = vadd.f32 %v1015, %v926
  %v1017 = vadd.f32 %v1016, %v930
  %v1018 = vadd.f32 %v1017, %v934
  %v1019 = vadd.f32 %v1018, %v938
  %v1020 = vadd.f32 %v1019, %v942
  %v1021 = vrot.slane %v1020, 4
  %v1022 = vadd.f32 %v1020, %v1021
  %v1023 = vrot.slane %v1022, 2
  %v1024 = vadd.f32 %v1022, %v1023
  %v1025 = vrot.slane %v1024, 1
  %v1026 = vadd.f32 %v1024, %v1025
  %v1031 = vrot.slane %v984, 7
  %v1032 = vrot.slane %v1005, 6
  %v1033 = vrot.slane %v1026, 5
  %vm1034 = vcmask 1040384
  %v1035 = vsel %vm1034, %v963, %v1031
  %vm1036 = vcmask 1042434
  %v1037 = vsel %vm1036, %v1032, %v1033
  %vm1038 = vcmask 1041408
  %v1039 = vsel %vm1038, %v1035, %v1037
  %v1041 = vlaneseq
  %vm1042 = vcmp.ge.s32.totalorder %v1041, 0
  %vm1043 = vcmp.lt.s32.totalorder %v1041, 512
  %vm1044 = vmand %vm1042, %vm1043
  %1045 = vst.msk [vmem:[%s5] sm:$0xf] %vm1044, %v1039
  // Predicated region
  $region22: #{pixel_discriminator.3} parent=0 // pred_check
    _
  $region23: #{pixel_discriminator.3} parent=0 // pred_check_branch
    %1047 = sbr.rel (0) target = $region25
  $region24: #{pixel_discriminator.3} parent=0 // pred_region
    _
  $region25: #{pixel_discriminator.3} parent=0 // pred_fallthru
    _
  // Predicated region
  $region26: #{pixel_discriminator.3} parent=0 // pred_check
    _
  $region27: #{pixel_discriminator.3} parent=0 // pred_check_branch
    %1049 = sbr.rel (0) target = $region29
  $region28: #{pixel_discriminator.3} parent=0 // pred_region
    _
  $region29: #{pixel_discriminator.3} parent=0 // pred_fallthru
    _

</llo_original>
